<compile_context>
chip_gen: v7x
topology: tpu7x:2x2x1
jax: 0.10.0
libtpu: 0.0.40
codegen_flags: <defaults>
</compile_context>

<pallas_src>
import functools

import jax
import jax.numpy as jnp
from jax.experimental import pallas as pl
from jax.experimental.pallas import tpu as pltpu

_NEG_FILL = -1e9  # finite "minus infinity" used to pad awkward N


def _infonce_kernel(s_ref, row_ref, colm_ref, coll_ref, diag_ref,
                    m_row, l_row, *, inv_tau, n, tm, tn):
    i = pl.program_id(0)          # row-tile index (outer, "parallel")
    j = pl.program_id(1)          # col-tile index (inner, "arbitrary")
    ncol = pl.num_programs(1)

    row_lo = i * tm
    col_lo = j * tn

    x = s_ref[...].astype(jnp.float32) * inv_tau              # (tm, tn) logits

    # ---------------- per-row-tile init (start of the j sweep) --------------
    @pl.when(j == 0)
    def _init():
        m_row[...] = jnp.full_like(m_row, -jnp.inf)
        l_row[...] = jnp.zeros_like(l_row)
        diag_ref[...] = jnp.zeros_like(diag_ref)

    # ---------------- online row logsumexp (one exp per element) ------------
    t_max = jnp.max(x, axis=1, keepdims=True)                  # (tm, 1)
    m_new = jnp.maximum(m_row[...], t_max)                     # (tm, 1)
    e = jnp.exp(x - m_new)                                     # (tm, tn)
    l_row[...] = (l_row[...] * jnp.exp(m_row[...] - m_new) +
                  jnp.sum(e, axis=1, keepdims=True))
    m_row[...] = m_new

    # ---------------- column partials for this tile (reuses e) --------------
    m_step = jnp.max(m_new, axis=0, keepdims=True)             # (1, 1)
    a = jnp.exp(m_new - m_step)                                # (tm, 1), <= 1
    colm_ref[...] = jnp.broadcast_to(m_step.reshape(1, 1, 1), (1, 1, tn))
    coll_ref[...] = jnp.sum(e * a, axis=0, keepdims=True).reshape(1, 1, tn)

    # ---------------- diagonal contribution (overlap tiles only) ------------
    @pl.when(jnp.logical_and(row_lo < col_lo + tn, col_lo < row_lo + tm))
    def _diag():
        riota = jax.lax.broadcasted_iota(jnp.int32, (tm, 1), 0)
        lane = jax.lax.broadcasted_iota(jnp.int32, (1, tn), 1)
        loc = riota + (row_lo - col_lo)                        # diag's local col
        hit = jnp.logical_and(lane == loc, (riota + row_lo) < n)
        d = jnp.sum(jnp.where(hit, x, 0.0), axis=1, keepdims=True)
        d = jnp.sum(d, axis=0, keepdims=True)
        diag_ref[...] += d.reshape(1, 1, 1)

    # ---------------- finalize row partial at the last column tile ----------
    @pl.when(j == ncol - 1)
    def _fin_rows():
        row_lse = jnp.log(l_row[...]) + m_row[...]             # (tm, 1)
        riota = jax.lax.broadcasted_iota(jnp.int32, (tm, 1), 0)
        valid = (riota + row_lo) < n                           # mask padded rows
        r = jnp.sum(jnp.where(valid, row_lse, 0.0), axis=0, keepdims=True)
        row_ref[...] = r.reshape(1, 1, 1)


def _pick_block(dim, target, quantum):
    """Largest multiple of `quantum` that divides `dim` and is <= target.

    `dim` is always padded to a multiple of 128 (hence of `quantum`), so this
    always succeeds; the full-dim return is only a defensive fallback."""
    target = max(int(target), quantum)
    if dim <= target:
        return dim
    t = (min(target, dim) // quantum) * quantum
    while t >= quantum:
        if dim % t == 0:
            return t
        t -= quantum
    return dim


def infonce_loss(scores, tau=0.1, *, block_rows=512, block_cols=2048):
    """Pallas TPU InfoNCE forward. `scores` is a square (N, N) similarity matrix."""
    n, m = scores.shape
    if n != m:
        raise ValueError("scores must be a square (N, N) similarity matrix")
    inv_tau = 1.0 / float(tau)

    lane_q = 128
    sub_q = 16 if scores.dtype == jnp.bfloat16 else 8

    # Pad awkward N to a multiple of 128 with a large finite negative fill;
    # padded entries' exp underflows to exactly 0 and padded rows are masked,
    # so results are unaffected.  No padding (and no extra HBM pass) when N is
    # already a multiple of 128.
    n_pad = ((n + lane_q - 1) // lane_q) * lane_q
    if n_pad != n:
        scores = jnp.pad(scores, ((0, n_pad - n), (0, n_pad - n)),
                         constant_values=_NEG_FILL)

    tm = _pick_block(n_pad, block_rows, sub_q)     # sublane tile (rows)
    tn = _pick_block(n_pad, block_cols, lane_q)    # lane tile (cols)
    nrow, ncol = n_pad // tm, n_pad // tn

    kernel = functools.partial(_infonce_kernel, inv_tau=inv_tau,
                               n=n, tm=tm, tn=tn)

    row_part, col_m, col_l, diag_part = pl.pallas_call(
        kernel,
        out_shape=(
            jax.ShapeDtypeStruct((nrow, 1, 1), jnp.float32),      # sum row LSE / tile
            jax.ShapeDtypeStruct((nrow, 1, n_pad), jnp.float32),  # col partial max
            jax.ShapeDtypeStruct((nrow, 1, n_pad), jnp.float32),  # col partial sumexp
            jax.ShapeDtypeStruct((nrow, 1, 1), jnp.float32),      # diag partial
        ),
        grid_spec=pltpu.PrefetchScalarGridSpec(
            num_scalar_prefetch=0,
            grid=(nrow, ncol),
            in_specs=[pl.BlockSpec((tm, tn), lambda i, j: (i, j))],
            out_specs=[
                pl.BlockSpec((1, 1, 1), lambda i, j: (i, 0, 0)),
                pl.BlockSpec((1, 1, tn), lambda i, j: (i, 0, j)),
                pl.BlockSpec((1, 1, tn), lambda i, j: (i, 0, j)),
                pl.BlockSpec((1, 1, 1), lambda i, j: (i, 0, 0)),
            ],
            scratch_shapes=[
                pltpu.VMEM((tm, 1), jnp.float32),   # running row max
                pltpu.VMEM((tm, 1), jnp.float32),   # running row sum-exp
            ],
        ),
        compiler_params=pltpu.CompilerParams(
            # Row-tile axis carries no cross-tile state -> megacore-safe on v7x.
            dimension_semantics=("parallel", "arbitrary"),
            vmem_limit_bytes=48 * 1024 * 1024,
        ),
    )(scores)

    # O(nrow * N) epilogue: merge column (max, sumexp) partials and combine.
    cm = col_m[:, 0, :n]                                   # (nrow, n)
    cl = col_l[:, 0, :n]
    cmax = jnp.max(cm, axis=0, keepdims=True)              # (1, n)
    col_lse = jnp.log(jnp.sum(cl * jnp.exp(cm - cmax), axis=0)) + cmax[0]
    total = jnp.sum(row_part) + jnp.sum(col_lse) - 2.0 * jnp.sum(diag_part)
    return total / n


def _reference_infonce(scores, tau=0.1):
    """Pure-JAX reference mirroring the PyTorch forward exactly."""
    e = jnp.exp(scores.astype(jnp.float32) / tau)
    i2t = e / jnp.sum(e, axis=1, keepdims=True)
    t2i = e.T / jnp.sum(e.T, axis=1, keepdims=True)
    cost_i2t = -jnp.mean(jnp.log(jnp.diagonal(i2t)))
    cost_t2i = -jnp.mean(jnp.log(jnp.diagonal(t2i)))
    return cost_i2t + cost_t2i


if __name__ == "__main__":
    key = jax.random.PRNGKey(0)
    k1, k2 = jax.random.split(key)

    # 1) Multi-tile path: N=384 with 128x128 blocks -> 3x3 grid; exercises the
    #    online row LSE, per-tile column partials, diag-overlap tiles and the
    #    wrapper merge.
    N1 = 384
    scores1 = jax.random.normal(k1, (N1, N1), dtype=jnp.float32) * 0.5
    out1 = jax.block_until_ready(
        infonce_loss(scores1, tau=0.1, block_rows=128, block_cols=128))
    ref1 = _reference_infonce(scores1, tau=0.1)
    assert jnp.allclose(out1, ref1, rtol=2e-4, atol=1e-3), (out1, ref1)

    # 2) Awkward N (not a multiple of 128): N=200 pads to 256; small 64x128
    #    blocks -> 4x2 grid; exercises padded-row/col masking and tm != tn
    #    diagonal overlap.
    N2 = 200
    scores2 = jax.random.normal(k2, (N2, N2), dtype=jnp.float32) * 0.5
    out2 = jax.block_until_ready(
        infonce_loss(scores2, tau=0.2, block_rows=64, block_cols=128))
    ref2 = _reference_infonce(scores2, tau=0.2)
    assert jnp.allclose(out2, ref2, rtol=2e-4, atol=1e-3), (out2, ref2)

    # 3) Single-tile path with default (large) tile targets.
    out3 = jax.block_until_ready(infonce_loss(scores1, tau=0.1))
    assert jnp.allclose(out3, ref1, rtol=2e-4, atol=1e-3), (out3, ref1)

    print("KERNEL_OK")
</pallas_src>

<mosaic_0001>
module attributes {stable_mosaic.version = 11 : i64} {
  func.func @_infonce_kernel(%arg0: i32, %arg1: i32, %arg2: memref<128x128xf32, #tpu.memory_space<vmem>>, %arg3: memref<1x1x1xf32, #tpu.memory_space<vmem>>, %arg4: memref<1x1x128xf32, #tpu.memory_space<vmem>>, %arg5: memref<1x1x128xf32, #tpu.memory_space<vmem>>, %arg6: memref<1x1x1xf32, #tpu.memory_space<vmem>>, %arg7: memref<128x1xf32, #tpu.memory_space<vmem>>, %arg8: memref<128x1xf32, #tpu.memory_space<vmem>>) attributes {dimension_semantics = [#tpu.dimension_semantics<parallel>, #tpu.dimension_semantics<arbitrary>], iteration_bounds = array<i64: 3, 3>, scalar_prefetch = 0 : i64, scratch_operands = 2 : i64, tpu.core_type = #tpu.core_type<tc>, window_params = [{transform_indices = @transform_0, window_bounds = array<i64: 128, 128>}, {transform_indices = @transform_1, window_bounds = array<i64: 1, 1, 1>}, {transform_indices = @transform_2, window_bounds = array<i64: 1, 1, 128>}, {transform_indices = @transform_3, window_bounds = array<i64: 1, 1, 128>}, {transform_indices = @transform_4, window_bounds = array<i64: 1, 1, 1>}]} {
    %c128_i32 = arith.constant 128 : i32
    %0 = arith.muli %arg0, %c128_i32 : i32
    %c128_i32_0 = arith.constant 128 : i32
    %1 = arith.muli %arg1, %c128_i32_0 : i32
    %c0 = arith.constant 0 : index
    %c0_1 = arith.constant 0 : index
    %2 = vector.load %arg2[%c0, %c0_1] : memref<128x128xf32, #tpu.memory_space<vmem>>, vector<128x128xf32>
    %cst = arith.constant 1.000000e+01 : f32
    %3 = vector.broadcast %cst : f32 to vector<128x128xf32>
    %4 = arith.mulf %2, %3 : vector<128x128xf32>
    %c0_i32 = arith.constant 0 : i32
    %5 = arith.cmpi eq, %arg1, %c0_i32 : i32
    %6 = arith.extui %5 : i1 to i32
    %c0_i32_2 = arith.constant 0 : i32
    %7 = arith.cmpi ne, %6, %c0_i32_2 : i32
    scf.if %7 {
      %cst_27 = arith.constant 0xFF800000 : f32
      %50 = vector.broadcast %cst_27 : f32 to vector<128x1xf32>
      %c0_28 = arith.constant 0 : index
      %c0_29 = arith.constant 0 : index
      %51 = vector.load %arg7[%c0_28, %c0_29] : memref<128x1xf32, #tpu.memory_space<vmem>>, vector<128x1xf32>
      tpu.vector_store %arg7[%c0_28, %c0_29], %50 {strides = array<i32>} : memref<128x1xf32, #tpu.memory_space<vmem>>, vector<128x1xf32>,
      %cst_30 = arith.constant 0.000000e+00 : f32
      %52 = vector.broadcast %cst_30 : f32 to vector<128x1xf32>
      %c0_31 = arith.constant 0 : index
      %c0_32 = arith.constant 0 : index
      %53 = vector.load %arg8[%c0_31, %c0_32] : memref<128x1xf32, #tpu.memory_space<vmem>>, vector<128x1xf32>
      tpu.vector_store %arg8[%c0_31, %c0_32], %52 {strides = array<i32>} : memref<128x1xf32, #tpu.memory_space<vmem>>, vector<128x1xf32>,
      %cst_33 = arith.constant 0.000000e+00 : f32
      %54 = vector.broadcast %cst_33 : f32 to vector<1x1x1xf32>
      %c0_34 = arith.constant 0 : index
      %c0_35 = arith.constant 0 : index
      %c0_36 = arith.constant 0 : index
      %55 = vector.load %arg6[%c0_34, %c0_35, %c0_36] : memref<1x1x1xf32, #tpu.memory_space<vmem>>, vector<1x1x1xf32>
      tpu.vector_store %arg6[%c0_34, %c0_35, %c0_36], %54 {strides = array<i32>} : memref<1x1x1xf32, #tpu.memory_space<vmem>>, vector<1x1x1xf32>,
    } else {
    }
    %cst_3 = arith.constant dense<0xFF800000> : vector<128xf32>
    %8 = vector.multi_reduction <maximumf>, %4, %cst_3 [1] : vector<128x128xf32> to vector<128xf32>
    %9 = vector.shape_cast %8 : vector<128xf32> to vector<128x1xf32>
    %c0_4 = arith.constant 0 : index
    %c0_5 = arith.constant 0 : index
    %10 = vector.load %arg7[%c0_4, %c0_5] : memref<128x1xf32, #tpu.memory_space<vmem>>, vector<128x1xf32>
    %11 = arith.maximumf %10, %9 : vector<128x1xf32>
    %12 = vector.broadcast %11 : vector<128x1xf32> to vector<128x128xf32>
    %13 = arith.subf %4, %12 : vector<128x128xf32>
    %14 = math.exp %13 : vector<128x128xf32>
    %c0_6 = arith.constant 0 : index
    %c0_7 = arith.constant 0 : index
    %15 = vector.load %arg8[%c0_6, %c0_7] : memref<128x1xf32, #tpu.memory_space<vmem>>, vector<128x1xf32>
    %c0_8 = arith.constant 0 : index
    %c0_9 = arith.constant 0 : index
    %16 = vector.load %arg7[%c0_8, %c0_9] : memref<128x1xf32, #tpu.memory_space<vmem>>, vector<128x1xf32>
    %17 = arith.subf %16, %11 : vector<128x1xf32>
    %18 = math.exp %17 : vector<128x1xf32>
    %19 = arith.mulf %15, %18 : vector<128x1xf32>
    %cst_10 = arith.constant dense<0.000000e+00> : vector<128xf32>
    %20 = vector.multi_reduction <add>, %14, %cst_10 [1] : vector<128x128xf32> to vector<128xf32>
    %21 = vector.shape_cast %20 : vector<128xf32> to vector<128x1xf32>
    %22 = arith.addf %19, %21 : vector<128x1xf32>
    %c0_11 = arith.constant 0 : index
    %c0_12 = arith.constant 0 : index
    %23 = vector.load %arg8[%c0_11, %c0_12] : memref<128x1xf32, #tpu.memory_space<vmem>>, vector<128x1xf32>
    tpu.vector_store %arg8[%c0_11, %c0_12], %22 {strides = array<i32>} : memref<128x1xf32, #tpu.memory_space<vmem>>, vector<128x1xf32>,
    %c0_13 = arith.constant 0 : index
    %c0_14 = arith.constant 0 : index
    %24 = vector.load %arg7[%c0_13, %c0_14] : memref<128x1xf32, #tpu.memory_space<vmem>>, vector<128x1xf32>
    tpu.vector_store %arg7[%c0_13, %c0_14], %11 {strides = array<i32>} : memref<128x1xf32, #tpu.memory_space<vmem>>, vector<128x1xf32>,
    %cst_15 = arith.constant dense<0xFF800000> : vector<1xf32>
    %25 = vector.multi_reduction <maximumf>, %11, %cst_15 [0] : vector<128x1xf32> to vector<1xf32>
    %26 = vector.shape_cast %25 : vector<1xf32> to vector<1x1xf32>
    %27 = vector.broadcast %26 : vector<1x1xf32> to vector<128x1xf32>
    %28 = arith.subf %11, %27 : vector<128x1xf32>
    %29 = math.exp %28 : vector<128x1xf32>
    %30 = vector.shape_cast %26 : vector<1x1xf32> to vector<1x1x1xf32>
    %31 = vector.shape_cast %30 : vector<1x1x1xf32> to vector<1x1x1xf32>
    %32 = vector.broadcast %31 : vector<1x1x1xf32> to vector<1x1x128xf32>
    %c0_16 = arith.constant 0 : index
    %c0_17 = arith.constant 0 : index
    %c0_18 = arith.constant 0 : index
    %33 = vector.load %arg4[%c0_16, %c0_17, %c0_18] : memref<1x1x128xf32, #tpu.memory_space<vmem>>, vector<1x1x128xf32>
    tpu.vector_store %arg4[%c0_16, %c0_17, %c0_18], %32 {strides = array<i32>} : memref<1x1x128xf32, #tpu.memory_space<vmem>>, vector<1x1x128xf32>,
    %34 = vector.broadcast %29 : vector<128x1xf32> to vector<128x128xf32>
    %35 = arith.mulf %14, %34 : vector<128x128xf32>
    %cst_19 = arith.constant dense<0.000000e+00> : vector<128xf32>
    %36 = vector.multi_reduction <add>, %35, %cst_19 [0] : vector<128x128xf32> to vector<128xf32>
    %37 = vector.shape_cast %36 : vector<128xf32> to vector<1x128xf32>
    %38 = vector.shape_cast %37 : vector<1x128xf32> to vector<1x1x128xf32>
    %c0_20 = arith.constant 0 : index
    %c0_21 = arith.constant 0 : index
    %c0_22 = arith.constant 0 : index
    %39 = vector.load %arg5[%c0_20, %c0_21, %c0_22] : memref<1x1x128xf32, #tpu.memory_space<vmem>>, vector<1x1x128xf32>
    tpu.vector_store %arg5[%c0_20, %c0_21, %c0_22], %38 {strides = array<i32>} : memref<1x1x128xf32, #tpu.memory_space<vmem>>, vector<1x1x128xf32>,
    %c128_i32_23 = arith.constant 128 : i32
    %40 = arith.addi %1, %c128_i32_23 : i32
    %41 = arith.cmpi slt, %0, %40 : i32
    %c128_i32_24 = arith.constant 128 : i32
    %42 = arith.addi %0, %c128_i32_24 : i32
    %43 = arith.cmpi slt, %1, %42 : i32
    %44 = arith.andi %41, %43 : i1
    %45 = arith.extui %44 : i1 to i32
    %c0_i32_25 = arith.constant 0 : i32
    %46 = arith.cmpi ne, %45, %c0_i32_25 : i32
    scf.if %46 {
      %50 = tpu.iota {dimensions = array<i32: 0>} : vector<128x1xi32>
      %51 = tpu.iota {dimensions = array<i32: 1>} : vector<1x128xi32>
      %52 = arith.subi %0, %1 : i32
      %53 = vector.broadcast %52 : i32 to vector<128x1xi32>
      %54 = arith.addi %50, %53 : vector<128x1xi32>
      %55 = vector.broadcast %51 : vector<1x128xi32> to vector<128x128xi32>
      %56 = vector.broadcast %54 : vector<128x1xi32> to vector<128x128xi32>
      %57 = arith.cmpi eq, %55, %56 : vector<128x128xi32>
      %58 = vector.broadcast %0 : i32 to vector<128x1xi32>
      %59 = arith.addi %50, %58 : vector<128x1xi32>
      %c384_i32 = arith.constant 384 : i32
      %60 = vector.broadcast %c384_i32 : i32 to vector<128x1xi32>
      %61 = arith.cmpi slt, %59, %60 : vector<128x1xi32>
      %62 = vector.broadcast %61 : vector<128x1xi1> to vector<128x128xi1>
      %63 = arith.andi %57, %62 : vector<128x128xi1>
      %cst_27 = arith.constant 0.000000e+00 : f32
      %64 = vector.broadcast %cst_27 : f32 to vector<128x128xf32>
      %65 = arith.select %63, %4, %64 : vector<128x128xi1>, vector<128x128xf32>
      %cst_28 = arith.constant dense<0.000000e+00> : vector<128xf32>
      %66 = vector.multi_reduction <add>, %65, %cst_28 [1] : vector<128x128xf32> to vector<128xf32>
      %67 = vector.shape_cast %66 : vector<128xf32> to vector<128x1xf32>
      %cst_29 = arith.constant dense<0.000000e+00> : vector<1xf32>
      %68 = vector.multi_reduction <add>, %67, %cst_29 [0] : vector<128x1xf32> to vector<1xf32>
      %69 = vector.shape_cast %68 : vector<1xf32> to vector<1x1xf32>
      %c0_30 = arith.constant 0 : index
      %c0_31 = arith.constant 0 : index
      %c0_32 = arith.constant 0 : index
      %70 = vector.load %arg6[%c0_30, %c0_31, %c0_32] : memref<1x1x1xf32, #tpu.memory_space<vmem>>, vector<1x1x1xf32>
      %71 = vector.shape_cast %69 : vector<1x1xf32> to vector<1x1x1xf32>
      %72 = arith.addf %70, %71 : vector<1x1x1xf32>
      %c0_33 = arith.constant 0 : index
      %c0_34 = arith.constant 0 : index
      %c0_35 = arith.constant 0 : index
      %73 = vector.load %arg6[%c0_33, %c0_34, %c0_35] : memref<1x1x1xf32, #tpu.memory_space<vmem>>, vector<1x1x1xf32>
      tpu.vector_store %arg6[%c0_33, %c0_34, %c0_35], %72 {strides = array<i32>} : memref<1x1x1xf32, #tpu.memory_space<vmem>>, vector<1x1x1xf32>,
    } else {
    }
    %c2_i32 = arith.constant 2 : i32
    %47 = arith.cmpi eq, %arg1, %c2_i32 : i32
    %48 = arith.extui %47 : i1 to i32
    %c0_i32_26 = arith.constant 0 : i32
    %49 = arith.cmpi ne, %48, %c0_i32_26 : i32
    scf.if %49 {
      %c0_27 = arith.constant 0 : index
      %c0_28 = arith.constant 0 : index
      %50 = vector.load %arg8[%c0_27, %c0_28] : memref<128x1xf32, #tpu.memory_space<vmem>>, vector<128x1xf32>
      %51 = math.log %50 : vector<128x1xf32>
      %c0_29 = arith.constant 0 : index
      %c0_30 = arith.constant 0 : index
      %52 = vector.load %arg7[%c0_29, %c0_30] : memref<128x1xf32, #tpu.memory_space<vmem>>, vector<128x1xf32>
      %53 = arith.addf %51, %52 : vector<128x1xf32>
      %54 = tpu.iota {dimensions = array<i32: 0>} : vector<128x1xi32>
      %55 = vector.broadcast %0 : i32 to vector<128x1xi32>
      %56 = arith.addi %54, %55 : vector<128x1xi32>
      %c384_i32 = arith.constant 384 : i32
      %57 = vector.broadcast %c384_i32 : i32 to vector<128x1xi32>
      %58 = arith.cmpi slt, %56, %57 : vector<128x1xi32>
      %cst_31 = arith.constant 0.000000e+00 : f32
      %59 = vector.broadcast %cst_31 : f32 to vector<128x1xf32>
      %60 = arith.select %58, %53, %59 : vector<128x1xi1>, vector<128x1xf32>
      %cst_32 = arith.constant dense<0.000000e+00> : vector<1xf32>
      %61 = vector.multi_reduction <add>, %60, %cst_32 [0] : vector<128x1xf32> to vector<1xf32>
      %62 = vector.shape_cast %61 : vector<1xf32> to vector<1x1xf32>
      %63 = vector.shape_cast %62 : vector<1x1xf32> to vector<1x1x1xf32>
      %c0_33 = arith.constant 0 : index
      %c0_34 = arith.constant 0 : index
      %c0_35 = arith.constant 0 : index
      %64 = vector.load %arg3[%c0_33, %c0_34, %c0_35] : memref<1x1x1xf32, #tpu.memory_space<vmem>>, vector<1x1x1xf32>
      tpu.vector_store %arg3[%c0_33, %c0_34, %c0_35], %63 {strides = array<i32>} : memref<1x1x1xf32, #tpu.memory_space<vmem>>, vector<1x1x1xf32>,
    } else {
    }
    return
  }
  func.func @transform_0(%arg0: i32, %arg1: i32) -> (i32, i32) {
    %c0_i32 = arith.constant 0 : i32
    return %arg0, %arg1 : i32, i32
  }
  func.func @transform_1(%arg0: i32, %arg1: i32) -> (i32, i32, i32) {
    %c0_i32 = arith.constant 0 : i32
    %c0_i32_0 = arith.constant 0 : i32
    %c0_i32_1 = arith.constant 0 : i32
    return %arg0, %c0_i32, %c0_i32_0 : i32, i32, i32
  }
  func.func @transform_2(%arg0: i32, %arg1: i32) -> (i32, i32, i32) {
    %c0_i32 = arith.constant 0 : i32
    %c0_i32_0 = arith.constant 0 : i32
    return %arg0, %c0_i32, %arg1 : i32, i32, i32
  }
  func.func @transform_3(%arg0: i32, %arg1: i32) -> (i32, i32, i32) {
    %c0_i32 = arith.constant 0 : i32
    %c0_i32_0 = arith.constant 0 : i32
    return %arg0, %c0_i32, %arg1 : i32, i32, i32
  }
  func.func @transform_4(%arg0: i32, %arg1: i32) -> (i32, i32, i32) {
    %c0_i32 = arith.constant 0 : i32
    %c0_i32_0 = arith.constant 0 : i32
    %c0_i32_1 = arith.constant 0 : i32
    return %arg0, %c0_i32, %c0_i32_0 : i32, i32, i32
  }
}

</mosaic_0001>

<llo_original>
// kernel: tpu_custom_call.1
$region0: #{tpu_custom_call.1}
  #allocation0 [shape = 'u32[]', space=smem, size = 0x4, offset = 0x4, fixed_abs, tag = 'smem constant byte address 0x4 - core index']
  #allocation1 [shape = 'u32[144,128]{1,0:T(1,128)}', space=vmem, size = 0x12000, scoped, tag = 'internal scratch']
  #allocation2 [shape = 'f32[128,1]{1,0:T(8,128)}', space=vmem, size = 0x10000, scoped, tag = 'scratch operand']
  #allocation3 [shape = 'f32[128,1]{1,0:T(8,128)}', space=vmem, size = 0x10000, scoped, tag = 'scratch operand']
  %s0 = inlined_call_operand.hbm [shape: f32[384,384], index: 0, kind: input, shape index: {}]
  %s1 = inlined_call_operand.vmem [shape: f32[3,1,1], index: 1, kind: output, shape index: {0}]
  %s2 = inlined_call_operand.hbm [shape: f32[3,1,384], index: 2, kind: output, shape index: {1}]
  %s3 = inlined_call_operand.hbm [shape: f32[3,1,384], index: 3, kind: output, shape index: {2}]
  %s4 = inlined_call_operand.vmem [shape: f32[3,1,1], index: 4, kind: output, shape index: {3}]
  %5 = xla_tuple %s1, %s2, %s3, %s4
  %s6 = sld [smem:[#allocation0]]
  $region77: #{tpu_custom_call.1} parent=0
    _
  %s8 = ssub.s32 1, %s6
  %s9 = scalar_select 0, %s8, %s6
  $region1: #{tpu_custom_call.1} parent=0
    #allocation4 [shape = 'u8[131072]{0}', space=vmem, size = 0x20000, scoped, tag = 'input window, operand 0']
    #allocation5 [shape = 's32[2]{0}', space=sflag, size = 0x8, scoped, tag = 'scoped memory for tpu_custom_call.1']
    #allocation6 [shape = 's32[2]{0}', space=sflag, size = 0x8, scoped, tag = 'scoped memory for tpu_custom_call.1']
    #allocation7 [shape = 'u8[1024]{0}', space=vmem, size = 0x400, scoped, tag = 'output window, operand 1']
    #allocation8 [shape = 'u8[1024]{0}', space=vmem, size = 0x400, scoped, tag = 'output window, operand 2']
    #allocation9 [shape = 's32[2]{0}', space=sflag, size = 0x8, scoped, tag = 'scoped memory for tpu_custom_call.1']
    %10 = vsyncpa [#allocation5], 0
    %s11 = scalar_lea.sflag [#allocation5], 1
    %12 = vsyncpa %s11, 0
    %13 = vsyncpa [#allocation6], 0
    %s14 = scalar_lea.sflag [#allocation6], 1
    %15 = vsyncpa %s14, 0
    %16 = vsyncpa [#allocation9], 0
    %s17 = scalar_lea.sflag [#allocation9], 1
    %18 = vsyncpa %s17, 0
    loop: start=0, step=1, limit=11
    $region2: #{tpu_custom_call.1} parent=1 // loop_pre_header
      _
    $region3: #{tpu_custom_call.1} parent=1 // loop_header
      %s20 = sphi 0, %s24
      %p21 = scmp.ge.s32.totalorder %s20, 11
      %s27 = sphi 0, %s39
      %s28 = sphi 0, %s35
      %s29 = sphi 0, %s27
      %s30 = sphi 0, %s28
      %s31 = sphi 0, %s29
      %s32 = sphi 0, %s30
      %s44 = sphi 0, %s46
      %s47 = sphi 0, %s44
      %s48 = sphi 0, %s47
      %s64 = sphi 0, %s48
      %s70 = sphi 0, %s72
      %s73 = sphi 0, %s70
      %s74 = sphi 0, %s73
      %s90 = sphi 0, %s74
      %s98 = sphi 0, %s100
      %s101 = sphi 0, %s98
      %s102 = sphi 0, %s101
      %s118 = sphi 0, %s102
      %s126 = sphi 0, %s128
      %s129 = sphi 0, %s126
      %s130 = sphi 0, %s129
      %s146 = sphi 0, %s130
      %s152 = sphi 0, %s154
      %s155 = sphi 0, %s152
      %s156 = sphi 0, %s155
      %s172 = sphi 0, %s156
    $region4: #{tpu_custom_call.1} parent=1 // loop_header_branch
      %23 = sbr.rel (%p21) target = $region8
    $region5: #{tpu_custom_call.1} parent=1 // loop_body
      %s25 = ssub.s32 %s20, 1
      %s26 = ssub.s32 %s20, 2
      %s33 = sadd.s32 1, %s28
      %p34 = scmp.ge.s32.totalorder %s33, 3
      %s35 = scalar_select %p34, 0, %s33
      %s36 = sadd.s32 1, %s27
      %s37 = scalar_select %p34, %s36, %s27
      %p38 = scmp.ge.s32.totalorder %s37, 3
      %s39 = scalar_select %p38, 0, %s37
      %s40 = ssub.s32 %s27, %s39
      %s41 = ssub.s32 %s28, %s35
      %s42 = sor.u32 %s40, %s41
      %p43 = scmp.eq.s32.totalorder %s42, 0
      %s45 = sadd.s32 %s44, 1
      %s46 = scalar_select %p43, %s44, %s45
      %p49 = pneg %p43
      %p50 = scmp.eq.s32.totalorder %s20, 8
      %p51 = por %p49, %p50
      %p52 = scmp.ne.s32.totalorder %s44, %s47
      %p53 = scmp.eq.s32.totalorder %s20, 0
      %p54 = por %p52, %p53
      %p55 = scmp.ne.s32.totalorder %s44, %s47
      %p56 = scmp.eq.s32.totalorder %s25, 8
      %p57 = por %p55, %p56
      %p58 = scmp.ne.s32.totalorder %s47, %s48
      %p59 = scmp.eq.s32.totalorder %s25, 0
      %p60 = por %p58, %p59
      %p61 = scmp.ne.s32.totalorder %s47, %s48
      %p62 = scmp.eq.s32.totalorder %s26, 8
      %p63 = por %p61, %p62
      %p65 = scmp.ne.s32.totalorder %s48, %s64
      %p66 = scmp.eq.s32.totalorder %s26, 0
      %p67 = por %p65, %p66
      %s68 = ssub.s32 %s27, %s39
      %p69 = scmp.eq.s32.totalorder %s68, 0
      %s71 = sadd.s32 %s70, 1
      %s72 = scalar_select %p69, %s70, %s71
      %p75 = pneg %p69
      %p76 = scmp.eq.s32.totalorder %s20, 8
      %p77 = por %p75, %p76
      %p78 = scmp.ne.s32.totalorder %s70, %s73
      %p79 = scmp.eq.s32.totalorder %s20, 0
      %p80 = por %p78, %p79
      %p81 = scmp.ne.s32.totalorder %s70, %s73
      %p82 = scmp.eq.s32.totalorder %s25, 8
      %p83 = por %p81, %p82
      %p84 = scmp.ne.s32.totalorder %s73, %s74
      %p85 = scmp.eq.s32.totalorder %s25, 0
      %p86 = por %p84, %p85
      %p87 = scmp.ne.s32.totalorder %s73, %s74
      %p88 = scmp.eq.s32.totalorder %s26, 8
      %p89 = por %p87, %p88
      %p91 = scmp.ne.s32.totalorder %s74, %s90
      %p92 = scmp.eq.s32.totalorder %s26, 0
      %p93 = por %p91, %p92
      %s94 = ssub.s32 %s27, %s39
      %s95 = ssub.s32 %s28, %s35
      %s96 = sor.u32 %s94, %s95
      %p97 = scmp.eq.s32.totalorder %s96, 0
      %s99 = sadd.s32 %s98, 1
      %s100 = scalar_select %p97, %s98, %s99
      %p103 = pneg %p97
      %p104 = scmp.eq.s32.totalorder %s20, 8
      %p105 = por %p103, %p104
      %p106 = scmp.ne.s32.totalorder %s98, %s101
      %p107 = scmp.eq.s32.totalorder %s20, 0
      %p108 = por %p106, %p107
      %p109 = scmp.ne.s32.totalorder %s98, %s101
      %p110 = scmp.eq.s32.totalorder %s25, 8
      %p111 = por %p109, %p110
      %p112 = scmp.ne.s32.totalorder %s101, %s102
      %p113 = scmp.eq.s32.totalorder %s25, 0
      %p114 = por %p112, %p113
      %p115 = scmp.ne.s32.totalorder %s101, %s102
      %p116 = scmp.eq.s32.totalorder %s26, 8
      %p117 = por %p115, %p116
      %p119 = scmp.ne.s32.totalorder %s102, %s118
      %p120 = scmp.eq.s32.totalorder %s26, 0
      %p121 = por %p119, %p120
      %s122 = ssub.s32 %s27, %s39
      %s123 = ssub.s32 %s28, %s35
      %s124 = sor.u32 %s122, %s123
      %p125 = scmp.eq.s32.totalorder %s124, 0
      %s127 = sadd.s32 %s126, 1
      %s128 = scalar_select %p125, %s126, %s127
      %p131 = pneg %p125
      %p132 = scmp.eq.s32.totalorder %s20, 8
      %p133 = por %p131, %p132
      %p134 = scmp.ne.s32.totalorder %s126, %s129
      %p135 = scmp.eq.s32.totalorder %s20, 0
      %p136 = por %p134, %p135
      %p137 = scmp.ne.s32.totalorder %s126, %s129
      %p138 = scmp.eq.s32.totalorder %s25, 8
      %p139 = por %p137, %p138
      %p140 = scmp.ne.s32.totalorder %s129, %s130
      %p141 = scmp.eq.s32.totalorder %s25, 0
      %p142 = por %p140, %p141
      %p143 = scmp.ne.s32.totalorder %s129, %s130
      %p144 = scmp.eq.s32.totalorder %s26, 8
      %p145 = por %p143, %p144
      %p147 = scmp.ne.s32.totalorder %s130, %s146
      %p148 = scmp.eq.s32.totalorder %s26, 0
      %p149 = por %p147, %p148
      %s150 = ssub.s32 %s27, %s39
      %p151 = scmp.eq.s32.totalorder %s150, 0
      %s153 = sadd.s32 %s152, 1
      %s154 = scalar_select %p151, %s152, %s153
      %p157 = pneg %p151
      %p158 = scmp.eq.s32.totalorder %s20, 8
      %p159 = por %p157, %p158
      %p160 = scmp.ne.s32.totalorder %s152, %s155
      %p161 = scmp.eq.s32.totalorder %s20, 0
      %p162 = por %p160, %p161
      %p163 = scmp.ne.s32.totalorder %s152, %s155
      %p164 = scmp.eq.s32.totalorder %s25, 8
      %p165 = por %p163, %p164
      %p166 = scmp.ne.s32.totalorder %s155, %s156
      %p167 = scmp.eq.s32.totalorder %s25, 0
      %p168 = por %p166, %p167
      %p169 = scmp.ne.s32.totalorder %s155, %s156
      %p170 = scmp.eq.s32.totalorder %s26, 8
      %p171 = por %p169, %p170
      %p173 = scmp.ne.s32.totalorder %s156, %s172
      %p174 = scmp.eq.s32.totalorder %s26, 0
      %p175 = por %p173, %p174
      %p176 = scmp.le.s32.totalorder 1, %s20
      %p177 = scmp.lt.s32.totalorder %s20, 10
      %p178 = pnand %p176, %p177
      %p179 = pneg %p178
      // Predicated region
      $region9: #{tpu_custom_call.1} parent=5 // pred_check
        _
      $region10: #{tpu_custom_call.1} parent=5 // pred_check_branch
        %181 = sbr.rel (%p178) target = $region12
      $region11: #{tpu_custom_call.1} parent=5 // pred_region
        %s182 = ssub.s32 %s20, 1
      $region12: #{tpu_custom_call.1} parent=5 // pred_fallthru
        _
      %p183 = scmp.lt.s32.totalorder %s20, 9
      // Predicated region
      $region13: #{tpu_custom_call.1} parent=5 // pred_check
        %p184 = pneg %p183
      $region14: #{tpu_custom_call.1} parent=5 // pred_check_branch
        %186 = sbr.rel (%p184) target = $region16
      $region15: #{tpu_custom_call.1} parent=5 // pred_region
        // Predicated region
        $region17: #{tpu_custom_call.1} parent=15 // pred_check
          %p187 = pneg %p54
        $region18: #{tpu_custom_call.1} parent=15 // pred_check_branch
          %189 = sbr.rel (%p187) target = $region20
        $region19: #{tpu_custom_call.1} parent=15 // pred_region
          %s190 = sand.u32 %s44, 1
          %s191 = scalar_lea.sflag [#allocation5], %s190
          %s192 = sand.u32 %s44, 1
          %s193 = smul.addr %s192, 128
          %s194 = scalar_lea.vmem [#allocation4], %s193
          %s195 = smul.u32 16, %s27
          %s197 = ssub.s32 2048, 2048
          %198 = vsyncadd %s191, %s197
          %s199 = smul.addr %s195, 3
          %s200 = sadd.s32 %s28, %s199
          %s201 = smul.addr %s200, 128
          %s202 = scalar_lea.hbm %s0, %s201
          %s203 = sshll.u32 %s194, 4
          %s204 = int_to_ptr.vmem [resolvable:$true] %s203
          %209 = dma.hbm_to_vmem [thread:$0]  %s202, 2048, %s204, %s191, 384, 128, 8
        $region20: #{tpu_custom_call.1} parent=15 // pred_fallthru
          _
      $region16: #{tpu_custom_call.1} parent=5 // pred_fallthru
        _
      %p210 = scmp.le.s32.totalorder 1, %s20
      %p211 = scmp.lt.s32.totalorder %s20, 10
      %p212 = pnand %p210, %p211
      %p213 = pneg %p212
      // Predicated region
      $region21: #{tpu_custom_call.1} parent=5 // pred_check
        _
      $region22: #{tpu_custom_call.1} parent=5 // pred_check_branch
        %215 = sbr.rel (%p212) target = $region24
      $region23: #{tpu_custom_call.1} parent=5 // pred_region
        %s216 = ssub.s32 %s20, 1
        %s217 = sand.u32 %s47, 1
        %s218 = scalar_lea.sflag [#allocation5], %s217
        %s219 = sand.u32 %s47, 1
        %s220 = smul.addr %s219, 128
        %s221 = scalar_lea.vmem [#allocation4], %s220
        // Predicated region
        $region25: #{tpu_custom_call.1} parent=23 // pred_check
          %p222 = pneg %p60
        $region26: #{tpu_custom_call.1} parent=23 // pred_check_branch
          %224 = sbr.rel (%p222) target = $region28
        $region27: #{tpu_custom_call.1} parent=23 // pred_region
          %225 = dma.done %s218, 2048
        $region28: #{tpu_custom_call.1} parent=23 // pred_fallthru
          _
        %s226 = sand.u32 %s47, 1
        %s227 = scalar_lea.sflag [#allocation5], %s226
        %s228 = sand.u32 %s47, 1
        %s229 = smul.addr %s228, 128
        %s230 = scalar_lea.vmem [#allocation4], %s229
        %p231 = pneg %p60
        %p232 = pneg %p57
        %p233 = pneg %p86
        %p234 = pneg %p83
        %p235 = scmp.lt.s32.totalorder %s29, 2
        %s236 = scalar_select %p235, %s29, 2
        %s237 = scalar_lea.vmem %s1, %s236
        %p238 = pneg %p114
        %p239 = pneg %p111
        %s240 = sand.u32 %s101, 1
        %s241 = scalar_lea.sflag [#allocation6], %s240
        %s242 = sand.u32 %s101, 1
        %s243 = scalar_lea.vmem [#allocation7], %s242
        %p244 = pneg %p142
        %p245 = pneg %p139
        %s246 = sand.u32 %s129, 1
        %s247 = scalar_lea.sflag [#allocation9], %s246
        %s248 = sand.u32 %s129, 1
        %s249 = scalar_lea.vmem [#allocation8], %s248
        %p250 = pneg %p168
        %p251 = pneg %p165
        %p252 = scmp.lt.s32.totalorder %s29, 2
        %s253 = scalar_select %p252, %s29, 2
        %s254 = scalar_lea.vmem %s4, %s253
        %s255 = smul.u32 16, %s29
        %p256 = scmp.lt.s32.totalorder %s29, 2
        %s257 = scalar_select %p256, %s29, 2
        %s258 = scalar_lea.vmem %s1, %s257
        %p259 = scmp.lt.s32.totalorder %s29, 2
        %s260 = scalar_select %p259, %s29, 2
        %s261 = scalar_lea.vmem %s4, %s260
        %s262 = smul.u32 %s29, 128
        %s263 = smul.u32 %s30, 128
        %v264 = vld [vmem:[%s221] sm:$0xff]
        %v265 = vld [vmem:[%s221 + $0x8] sm:$0xff]
        %v266 = vld [vmem:[%s221 + $0x10] sm:$0xff]
        %v267 = vld [vmem:[%s221 + $0x18] sm:$0xff]
        %v268 = vld [vmem:[%s221 + $0x20] sm:$0xff]
        %v269 = vld [vmem:[%s221 + $0x28] sm:$0xff]
        %v270 = vld [vmem:[%s221 + $0x30] sm:$0xff]
        %v271 = vld [vmem:[%s221 + $0x38] sm:$0xff]
        %v272 = vld [vmem:[%s221 + $0x40] sm:$0xff]
        %v273 = vld [vmem:[%s221 + $0x48] sm:$0xff]
        %v274 = vld [vmem:[%s221 + $0x50] sm:$0xff]
        %v275 = vld [vmem:[%s221 + $0x58] sm:$0xff]
        %v276 = vld [vmem:[%s221 + $0x60] sm:$0xff]
        %v277 = vld [vmem:[%s221 + $0x68] sm:$0xff]
        %v278 = vld [vmem:[%s221 + $0x70] sm:$0xff]
        %v279 = vld [vmem:[%s221 + $0x78] sm:$0xff]
        %v280 = vmul.f32 %v264, 10.0
        %v281 = vmul.f32 %v265, 10.0
        %v282 = vmul.f32 %v266, 10.0
        %v283 = vmul.f32 %v267, 10.0
        %v284 = vmul.f32 %v268, 10.0
        %v285 = vmul.f32 %v269, 10.0
        %v286 = vmul.f32 %v270, 10.0
        %v287 = vmul.f32 %v271, 10.0
        %v288 = vmul.f32 %v272, 10.0
        %v289 = vmul.f32 %v273, 10.0
        %v290 = vmul.f32 %v274, 10.0
        %v291 = vmul.f32 %v275, 10.0
        %v292 = vmul.f32 %v276, 10.0
        %v293 = vmul.f32 %v277, 10.0
        %v294 = vmul.f32 %v278, 10.0
        %v295 = vmul.f32 %v279, 10.0
        %p296 = scmp.eq.s32.totalorder %s30, 0
        // Predicated region
        $region29: #{tpu_custom_call.1} parent=23 // pred_check
          %p297 = pneg %p296
        $region30: #{tpu_custom_call.1} parent=23 // pred_check_branch
          %299 = sbr.rel (%p297) target = $region32
        $region31: #{tpu_custom_call.1} parent=23 // pred_region
          %vm300 = vcmask 7168
          %301 = vst.msk [vmem:[#allocation2] sm:$0xff] %vm300, -inf
          %302 = vst.msk [vmem:[#allocation2 + $0x8] sm:$0xff] %vm300, -inf
          %303 = vst.msk [vmem:[#allocation2 + $0x10] sm:$0xff] %vm300, -inf
          %304 = vst.msk [vmem:[#allocation2 + $0x18] sm:$0xff] %vm300, -inf
          %305 = vst.msk [vmem:[#allocation2 + $0x20] sm:$0xff] %vm300, -inf
          %306 = vst.msk [vmem:[#allocation2 + $0x28] sm:$0xff] %vm300, -inf
          %307 = vst.msk [vmem:[#allocation2 + $0x30] sm:$0xff] %vm300, -inf
          %308 = vst.msk [vmem:[#allocation2 + $0x38] sm:$0xff] %vm300, -inf
          %309 = vst.msk [vmem:[#allocation2 + $0x40] sm:$0xff] %vm300, -inf
          %310 = vst.msk [vmem:[#allocation2 + $0x48] sm:$0xff] %vm300, -inf
          %311 = vst.msk [vmem:[#allocation2 + $0x50] sm:$0xff] %vm300, -inf
          %312 = vst.msk [vmem:[#allocation2 + $0x58] sm:$0xff] %vm300, -inf
          %313 = vst.msk [vmem:[#allocation2 + $0x60] sm:$0xff] %vm300, -inf
          %314 = vst.msk [vmem:[#allocation2 + $0x68] sm:$0xff] %vm300, -inf
          %315 = vst.msk [vmem:[#allocation2 + $0x70] sm:$0xff] %vm300, -inf
          %316 = vst.msk [vmem:[#allocation2 + $0x78] sm:$0xff] %vm300, -inf
          %317 = vst.msk [vmem:[#allocation3] sm:$0xff] %vm300, 0.0
          %318 = vst.msk [vmem:[#allocation3 + $0x8] sm:$0xff] %vm300, 0.0
          %319 = vst.msk [vmem:[#allocation3 + $0x10] sm:$0xff] %vm300, 0.0
          %320 = vst.msk [vmem:[#allocation3 + $0x18] sm:$0xff] %vm300, 0.0
          %321 = vst.msk [vmem:[#allocation3 + $0x20] sm:$0xff] %vm300, 0.0
          %322 = vst.msk [vmem:[#allocation3 + $0x28] sm:$0xff] %vm300, 0.0
          %323 = vst.msk [vmem:[#allocation3 + $0x30] sm:$0xff] %vm300, 0.0
          %324 = vst.msk [vmem:[#allocation3 + $0x38] sm:$0xff] %vm300, 0.0
          %325 = vst.msk [vmem:[#allocation3 + $0x40] sm:$0xff] %vm300, 0.0
          %326 = vst.msk [vmem:[#allocation3 + $0x48] sm:$0xff] %vm300, 0.0
          %327 = vst.msk [vmem:[#allocation3 + $0x50] sm:$0xff] %vm300, 0.0
          %328 = vst.msk [vmem:[#allocation3 + $0x58] sm:$0xff] %vm300, 0.0
          %329 = vst.msk [vmem:[#allocation3 + $0x60] sm:$0xff] %vm300, 0.0
          %330 = vst.msk [vmem:[#allocation3 + $0x68] sm:$0xff] %vm300, 0.0
          %331 = vst.msk [vmem:[#allocation3 + $0x70] sm:$0xff] %vm300, 0.0
          %332 = vst.msk [vmem:[#allocation3 + $0x78] sm:$0xff] %vm300, 0.0
          %vm333 = vcmask 0
          %334 = vst.msk [vmem:[%s261] sm:$0x1] %vm333, 0.0
        $region32: #{tpu_custom_call.1} parent=23 // pred_fallthru
          _
        %335 = vmax.xlane.f32.xlu0 %v280
        %v336 = vpop.xlane.xlu0 %335
        %337 = vmax.xlane.f32.xlu0 %v281
        %v338 = vpop.xlane.xlu0 %337
        %339 = vmax.xlane.f32.xlu0 %v282
        %v340 = vpop.xlane.xlu0 %339
        %341 = vmax.xlane.f32.xlu0 %v283
        %v342 = vpop.xlane.xlu0 %341
        %343 = vmax.xlane.f32.xlu0 %v284
        %v344 = vpop.xlane.xlu0 %343
        %345 = vmax.xlane.f32.xlu0 %v285
        %v346 = vpop.xlane.xlu0 %345
        %347 = vmax.xlane.f32.xlu0 %v286
        %v348 = vpop.xlane.xlu0 %347
        %349 = vmax.xlane.f32.xlu0 %v287
        %v350 = vpop.xlane.xlu0 %349
        %351 = vmax.xlane.f32.xlu0 %v288
        %v352 = vpop.xlane.xlu0 %351
        %353 = vmax.xlane.f32.xlu0 %v289
        %v354 = vpop.xlane.xlu0 %353
        %355 = vmax.xlane.f32.xlu0 %v290
        %v356 = vpop.xlane.xlu0 %355
        %357 = vmax.xlane.f32.xlu0 %v291
        %v358 = vpop.xlane.xlu0 %357
        %359 = vmax.xlane.f32.xlu0 %v292
        %v360 = vpop.xlane.xlu0 %359
        %361 = vmax.xlane.f32.xlu0 %v293
        %v362 = vpop.xlane.xlu0 %361
        %363 = vmax.xlane.f32.xlu0 %v294
        %v364 = vpop.xlane.xlu0 %363
        %365 = vmax.xlane.f32.xlu0 %v295
        %v366 = vpop.xlane.xlu0 %365
        %v367 = vld [vmem:[#allocation2] sm:$0xff]
        %v368 = vld [vmem:[#allocation2 + $0x8] sm:$0xff]
        %v369 = vld [vmem:[#allocation2 + $0x10] sm:$0xff]
        %v370 = vld [vmem:[#allocation2 + $0x18] sm:$0xff]
        %v371 = vld [vmem:[#allocation2 + $0x20] sm:$0xff]
        %v372 = vld [vmem:[#allocation2 + $0x28] sm:$0xff]
        %v373 = vld [vmem:[#allocation2 + $0x30] sm:$0xff]
        %v374 = vld [vmem:[#allocation2 + $0x38] sm:$0xff]
        %v375 = vld [vmem:[#allocation2 + $0x40] sm:$0xff]
        %v376 = vld [vmem:[#allocation2 + $0x48] sm:$0xff]
        %v377 = vld [vmem:[#allocation2 + $0x50] sm:$0xff]
        %v378 = vld [vmem:[#allocation2 + $0x58] sm:$0xff]
        %v379 = vld [vmem:[#allocation2 + $0x60] sm:$0xff]
        %v380 = vld [vmem:[#allocation2 + $0x68] sm:$0xff]
        %v381 = vld [vmem:[#allocation2 + $0x70] sm:$0xff]
        %v382 = vld [vmem:[#allocation2 + $0x78] sm:$0xff]
        %v383 = vmax.f32 %v367, %v336
        %v384 = vmax.f32 %v368, %v338
        %v385 = vmax.f32 %v369, %v340
        %v386 = vmax.f32 %v370, %v342
        %v387 = vmax.f32 %v371, %v344
        %v388 = vmax.f32 %v372, %v346
        %v389 = vmax.f32 %v373, %v348
        %v390 = vmax.f32 %v374, %v350
        %v391 = vmax.f32 %v375, %v352
        %v392 = vmax.f32 %v376, %v354
        %v393 = vmax.f32 %v377, %v356
        %v394 = vmax.f32 %v378, %v358
        %v395 = vmax.f32 %v379, %v360
        %v396 = vmax.f32 %v380, %v362
        %v397 = vmax.f32 %v381, %v364
        %v398 = vmax.f32 %v382, %v366
        %400 = vset.pattern.permute.xlu0 0
        %401 = vperm.xlu0 %400, %v383
        %v402 = vpop.permute.xlu0 %401
        %405 = vset.pattern.permute.xlu0 0
        %406 = vperm.xlu0 %405, %v384
        %v407 = vpop.permute.xlu0 %406
        %410 = vset.pattern.permute.xlu0 0
        %411 = vperm.xlu0 %410, %v385
        %v412 = vpop.permute.xlu0 %411
        %415 = vset.pattern.permute.xlu0 0
        %416 = vperm.xlu0 %415, %v386
        %v417 = vpop.permute.xlu0 %416
        %420 = vset.pattern.permute.xlu0 0
        %421 = vperm.xlu0 %420, %v387
        %v422 = vpop.permute.xlu0 %421
        %425 = vset.pattern.permute.xlu0 0
        %426 = vperm.xlu0 %425, %v388
        %v427 = vpop.permute.xlu0 %426
        %430 = vset.pattern.permute.xlu0 0
        %431 = vperm.xlu0 %430, %v389
        %v432 = vpop.permute.xlu0 %431
        %435 = vset.pattern.permute.xlu0 0
        %436 = vperm.xlu0 %435, %v390
        %v437 = vpop.permute.xlu0 %436
        %440 = vset.pattern.permute.xlu0 0
        %441 = vperm.xlu0 %440, %v391
        %v442 = vpop.permute.xlu0 %441
        %445 = vset.pattern.permute.xlu0 0
        %446 = vperm.xlu0 %445, %v392
        %v447 = vpop.permute.xlu0 %446
        %450 = vset.pattern.permute.xlu0 0
        %451 = vperm.xlu0 %450, %v393
        %v452 = vpop.permute.xlu0 %451
        %455 = vset.pattern.permute.xlu0 0
        %456 = vperm.xlu0 %455, %v394
        %v457 = vpop.permute.xlu0 %456
        %460 = vset.pattern.permute.xlu0 0
        %461 = vperm.xlu0 %460, %v395
        %v462 = vpop.permute.xlu0 %461
        %465 = vset.pattern.permute.xlu0 0
        %466 = vperm.xlu0 %465, %v396
        %v467 = vpop.permute.xlu0 %466
        %470 = vset.pattern.permute.xlu0 0
        %471 = vperm.xlu0 %470, %v397
        %v472 = vpop.permute.xlu0 %471
        %475 = vset.pattern.permute.xlu0 0
        %476 = vperm.xlu0 %475, %v398
        %v477 = vpop.permute.xlu0 %476
        %v479 = vsub.f32 %v280, %v402
        %v480 = vsub.f32 %v281, %v407
        %v481 = vsub.f32 %v282, %v412
        %v482 = vsub.f32 %v283, %v417
        %v483 = vsub.f32 %v284, %v422
        %v484 = vsub.f32 %v285, %v427
        %v485 = vsub.f32 %v286, %v432
        %v486 = vsub.f32 %v287, %v437
        %v487 = vsub.f32 %v288, %v442
        %v488 = vsub.f32 %v289, %v447
        %v489 = vsub.f32 %v290, %v452
        %v490 = vsub.f32 %v291, %v457
        %v491 = vsub.f32 %v292, %v462
        %v492 = vsub.f32 %v293, %v467
        %v493 = vsub.f32 %v294, %v472
        %v494 = vsub.f32 %v295, %v477
        %v495 = vmul.f32 %v479, 1.442695
        %v496 = vpow.pop %v495
        %v497 = vmul.f32 %v480, 1.442695
        %v498 = vpow.pop %v497
        %v499 = vmul.f32 %v481, 1.442695
        %v500 = vpow.pop %v499
        %v501 = vmul.f32 %v482, 1.442695
        %v502 = vpow.pop %v501
        %v503 = vmul.f32 %v483, 1.442695
        %v504 = vpow.pop %v503
        %v505 = vmul.f32 %v484, 1.442695
        %v506 = vpow.pop %v505
        %v507 = vmul.f32 %v485, 1.442695
        %v508 = vpow.pop %v507
        %v509 = vmul.f32 %v486, 1.442695
        %v510 = vpow.pop %v509
        %v511 = vmul.f32 %v487, 1.442695
        %v512 = vpow.pop %v511
        %v513 = vmul.f32 %v488, 1.442695
        %v514 = vpow.pop %v513
        %v515 = vmul.f32 %v489, 1.442695
        %v516 = vpow.pop %v515
        %v517 = vmul.f32 %v490, 1.442695
        %v518 = vpow.pop %v517
        %v519 = vmul.f32 %v491, 1.442695
        %v520 = vpow.pop %v519
        %v521 = vmul.f32 %v492, 1.442695
        %v522 = vpow.pop %v521
        %v523 = vmul.f32 %v493, 1.442695
        %v524 = vpow.pop %v523
        %v525 = vmul.f32 %v494, 1.442695
        %v526 = vpow.pop %v525
        %v527 = vld [vmem:[#allocation3] sm:$0xff]
        %v528 = vld [vmem:[#allocation3 + $0x8] sm:$0xff]
        %v529 = vld [vmem:[#allocation3 + $0x10] sm:$0xff]
        %v530 = vld [vmem:[#allocation3 + $0x18] sm:$0xff]
        %v531 = vld [vmem:[#allocation3 + $0x20] sm:$0xff]
        %v532 = vld [vmem:[#allocation3 + $0x28] sm:$0xff]
        %v533 = vld [vmem:[#allocation3 + $0x30] sm:$0xff]
        %v534 = vld [vmem:[#allocation3 + $0x38] sm:$0xff]
        %v535 = vld [vmem:[#allocation3 + $0x40] sm:$0xff]
        %v536 = vld [vmem:[#allocation3 + $0x48] sm:$0xff]
        %v537 = vld [vmem:[#allocation3 + $0x50] sm:$0xff]
        %v538 = vld [vmem:[#allocation3 + $0x58] sm:$0xff]
        %v539 = vld [vmem:[#allocation3 + $0x60] sm:$0xff]
        %v540 = vld [vmem:[#allocation3 + $0x68] sm:$0xff]
        %v541 = vld [vmem:[#allocation3 + $0x70] sm:$0xff]
        %v542 = vld [vmem:[#allocation3 + $0x78] sm:$0xff]
        %v543 = vsub.f32 %v367, %v383
        %v544 = vsub.f32 %v368, %v384
        %v545 = vsub.f32 %v369, %v385
        %v546 = vsub.f32 %v370, %v386
        %v547 = vsub.f32 %v371, %v387
        %v548 = vsub.f32 %v372, %v388
        %v549 = vsub.f32 %v373, %v389
        %v550 = vsub.f32 %v374, %v390
        %v551 = vsub.f32 %v375, %v391
        %v552 = vsub.f32 %v376, %v392
        %v553 = vsub.f32 %v377, %v393
        %v554 = vsub.f32 %v378, %v394
        %v555 = vsub.f32 %v379, %v395
        %v556 = vsub.f32 %v380, %v396
        %v557 = vsub.f32 %v381, %v397
        %v558 = vsub.f32 %v382, %v398
        %v559 = vmul.f32 %v543, 1.442695
        %v560 = vpow.pop %v559
        %v561 = vmul.f32 %v544, 1.442695
        %v562 = vpow.pop %v561
        %v563 = vmul.f32 %v545, 1.442695
        %v564 = vpow.pop %v563
        %v565 = vmul.f32 %v546, 1.442695
        %v566 = vpow.pop %v565
        %v567 = vmul.f32 %v547, 1.442695
        %v568 = vpow.pop %v567
        %v569 = vmul.f32 %v548, 1.442695
        %v570 = vpow.pop %v569
        %v571 = vmul.f32 %v549, 1.442695
        %v572 = vpow.pop %v571
        %v573 = vmul.f32 %v550, 1.442695
        %v574 = vpow.pop %v573
        %v575 = vmul.f32 %v551, 1.442695
        %v576 = vpow.pop %v575
        %v577 = vmul.f32 %v552, 1.442695
        %v578 = vpow.pop %v577
        %v579 = vmul.f32 %v553, 1.442695
        %v580 = vpow.pop %v579
        %v581 = vmul.f32 %v554, 1.442695
        %v582 = vpow.pop %v581
        %v583 = vmul.f32 %v555, 1.442695
        %v584 = vpow.pop %v583
        %v585 = vmul.f32 %v556, 1.442695
        %v586 = vpow.pop %v585
        %v587 = vmul.f32 %v557, 1.442695
        %v588 = vpow.pop %v587
        %v589 = vmul.f32 %v558, 1.442695
        %v590 = vpow.pop %v589
        %v591 = vmul.f32 %v527, %v560
        %v592 = vmul.f32 %v528, %v562
        %v593 = vmul.f32 %v529, %v564
        %v594 = vmul.f32 %v530, %v566
        %v595 = vmul.f32 %v531, %v568
        %v596 = vmul.f32 %v532, %v570
        %v597 = vmul.f32 %v533, %v572
        %v598 = vmul.f32 %v534, %v574
        %v599 = vmul.f32 %v535, %v576
        %v600 = vmul.f32 %v536, %v578
        %v601 = vmul.f32 %v537, %v580
        %v602 = vmul.f32 %v538, %v582
        %v603 = vmul.f32 %v539, %v584
        %v604 = vmul.f32 %v540, %v586
        %v605 = vmul.f32 %v541, %v588
        %v606 = vmul.f32 %v542, %v590
        %607 = vadd.xlane.f32.xlu0 %v496
        %v608 = vpop.xlane.xlu0 %607
        %609 = vadd.xlane.f32.xlu0 %v498
        %v610 = vpop.xlane.xlu0 %609
        %611 = vadd.xlane.f32.xlu0 %v500
        %v612 = vpop.xlane.xlu0 %611
        %613 = vadd.xlane.f32.xlu0 %v502
        %v614 = vpop.xlane.xlu0 %613
        %615 = vadd.xlane.f32.xlu0 %v504
        %v616 = vpop.xlane.xlu0 %615
        %617 = vadd.xlane.f32.xlu0 %v506
        %v618 = vpop.xlane.xlu0 %617
        %619 = vadd.xlane.f32.xlu0 %v508
        %v620 = vpop.xlane.xlu0 %619
        %621 = vadd.xlane.f32.xlu0 %v510
        %v622 = vpop.xlane.xlu0 %621
        %623 = vadd.xlane.f32.xlu0 %v512
        %v624 = vpop.xlane.xlu0 %623
        %625 = vadd.xlane.f32.xlu0 %v514
        %v626 = vpop.xlane.xlu0 %625
        %627 = vadd.xlane.f32.xlu0 %v516
        %v628 = vpop.xlane.xlu0 %627
        %629 = vadd.xlane.f32.xlu0 %v518
        %v630 = vpop.xlane.xlu0 %629
        %631 = vadd.xlane.f32.xlu0 %v520
        %v632 = vpop.xlane.xlu0 %631
        %633 = vadd.xlane.f32.xlu0 %v522
        %v634 = vpop.xlane.xlu0 %633
        %635 = vadd.xlane.f32.xlu0 %v524
        %v636 = vpop.xlane.xlu0 %635
        %637 = vadd.xlane.f32.xlu0 %v526
        %v638 = vpop.xlane.xlu0 %637
        %v639 = vadd.f32 %v591, %v608
        %v640 = vadd.f32 %v592, %v610
        %v641 = vadd.f32 %v593, %v612
        %v642 = vadd.f32 %v594, %v614
        %v643 = vadd.f32 %v595, %v616
        %v644 = vadd.f32 %v596, %v618
        %v645 = vadd.f32 %v597, %v620
        %v646 = vadd.f32 %v598, %v622
        %v647 = vadd.f32 %v599, %v624
        %v648 = vadd.f32 %v600, %v626
        %v649 = vadd.f32 %v601, %v628
        %v650 = vadd.f32 %v602, %v630
        %v651 = vadd.f32 %v603, %v632
        %v652 = vadd.f32 %v604, %v634
        %v653 = vadd.f32 %v605, %v636
        %v654 = vadd.f32 %v606, %v638
        %vm655 = vcmask 7168
        %656 = vst.msk [vmem:[#allocation3] sm:$0xff] %vm655, %v639
        %657 = vst.msk [vmem:[#allocation3 + $0x8] sm:$0xff] %vm655, %v640
        %658 = vst.msk [vmem:[#allocation3 + $0x10] sm:$0xff] %vm655, %v641
        %659 = vst.msk [vmem:[#allocation3 + $0x18] sm:$0xff] %vm655, %v642
        %660 = vst.msk [vmem:[#allocation3 + $0x20] sm:$0xff] %vm655, %v643
        %661 = vst.msk [vmem:[#allocation3 + $0x28] sm:$0xff] %vm655, %v644
        %662 = vst.msk [vmem:[#allocation3 + $0x30] sm:$0xff] %vm655, %v645
        %663 = vst.msk [vmem:[#allocation3 + $0x38] sm:$0xff] %vm655, %v646
        %664 = vst.msk [vmem:[#allocation3 + $0x40] sm:$0xff] %vm655, %v647
        %665 = vst.msk [vmem:[#allocation3 + $0x48] sm:$0xff] %vm655, %v648
        %666 = vst.msk [vmem:[#allocation3 + $0x50] sm:$0xff] %vm655, %v649
        %667 = vst.msk [vmem:[#allocation3 + $0x58] sm:$0xff] %vm655, %v650
        %668 = vst.msk [vmem:[#allocation3 + $0x60] sm:$0xff] %vm655, %v651
        %669 = vst.msk [vmem:[#allocation3 + $0x68] sm:$0xff] %vm655, %v652
        %670 = vst.msk [vmem:[#allocation3 + $0x70] sm:$0xff] %vm655, %v653
        %671 = vst.msk [vmem:[#allocation3 + $0x78] sm:$0xff] %vm655, %v654
        %672 = vst.msk [vmem:[#allocation2] sm:$0xff] %vm655, %v383
        %673 = vst.msk [vmem:[#allocation2 + $0x8] sm:$0xff] %vm655, %v384
        %674 = vst.msk [vmem:[#allocation2 + $0x10] sm:$0xff] %vm655, %v385
        %675 = vst.msk [vmem:[#allocation2 + $0x18] sm:$0xff] %vm655, %v386
        %676 = vst.msk [vmem:[#allocation2 + $0x20] sm:$0xff] %vm655, %v387
        %677 = vst.msk [vmem:[#allocation2 + $0x28] sm:$0xff] %vm655, %v388
        %678 = vst.msk [vmem:[#allocation2 + $0x30] sm:$0xff] %vm655, %v389
        %679 = vst.msk [vmem:[#allocation2 + $0x38] sm:$0xff] %vm655, %v390
        %680 = vst.msk [vmem:[#allocation2 + $0x40] sm:$0xff] %vm655, %v391
        %681 = vst.msk [vmem:[#allocation2 + $0x48] sm:$0xff] %vm655, %v392
        %682 = vst.msk [vmem:[#allocation2 + $0x50] sm:$0xff] %vm655, %v393
        %683 = vst.msk [vmem:[#allocation2 + $0x58] sm:$0xff] %vm655, %v394
        %684 = vst.msk [vmem:[#allocation2 + $0x60] sm:$0xff] %vm655, %v395
        %685 = vst.msk [vmem:[#allocation2 + $0x68] sm:$0xff] %vm655, %v396
        %686 = vst.msk [vmem:[#allocation2 + $0x70] sm:$0xff] %vm655, %v397
        %687 = vst.msk [vmem:[#allocation2 + $0x78] sm:$0xff] %vm655, %v398
        %v688 = vsel %vm655, %v383, -inf
        %v689 = vsel %vm655, %v384, -inf
        %v690 = vsel %vm655, %v385, -inf
        %v691 = vsel %vm655, %v386, -inf
        %v692 = vsel %vm655, %v387, -inf
        %v693 = vmax.f32 %v688, %v692
        %v694 = vsel %vm655, %v388, -inf
        %v695 = vmax.f32 %v689, %v694
        %v696 = vsel %vm655, %v389, -inf
        %v697 = vmax.f32 %v690, %v696
        %v698 = vsel %vm655, %v390, -inf
        %v699 = vmax.f32 %v691, %v698
        %v700 = vsel %vm655, %v391, -inf
        %v701 = vmax.f32 %v693, %v700
        %v702 = vsel %vm655, %v392, -inf
        %v703 = vmax.f32 %v695, %v702
        %v704 = vsel %vm655, %v393, -inf
        %v705 = vmax.f32 %v697, %v704
        %v706 = vsel %vm655, %v394, -inf
        %v707 = vmax.f32 %v699, %v706
        %v708 = vsel %vm655, %v395, -inf
        %v709 = vmax.f32 %v701, %v708
        %v710 = vsel %vm655, %v396, -inf
        %v711 = vmax.f32 %v703, %v710
        %v712 = vsel %vm655, %v397, -inf
        %v713 = vmax.f32 %v705, %v712
        %v714 = vsel %vm655, %v398, -inf
        %v715 = vmax.f32 %v707, %v714
        %v716 = vmax.f32 %v709, %v711
        %v717 = vmax.f32 %v713, %v715
        %v718 = vmax.f32 %v716, %v717
        %v719 = vrot.slane %v718, 4
        %v720 = vmax.f32 %v718, %v719
        %v721 = vrot.slane %v720, 2
        %v722 = vmax.f32 %v720, %v721
        %v723 = vrot.slane %v722, 1
        %v724 = vmax.f32 %v722, %v723
        %v725 = vsub.f32 %v383, %v724
        %v726 = vsub.f32 %v384, %v724
        %v727 = vsub.f32 %v385, %v724
        %v728 = vsub.f32 %v386, %v724
        %v729 = vsub.f32 %v387, %v724
        %v730 = vsub.f32 %v388, %v724
        %v731 = vsub.f32 %v389, %v724
        %v732 = vsub.f32 %v390, %v724
        %v733 = vsub.f32 %v391, %v724
        %v734 = vsub.f32 %v392, %v724
        %v735 = vsub.f32 %v393, %v724
        %v736 = vsub.f32 %v394, %v724
        %v737 = vsub.f32 %v395, %v724
        %v738 = vsub.f32 %v396, %v724
        %v739 = vsub.f32 %v397, %v724
        %v740 = vsub.f32 %v398, %v724
        %v741 = vmul.f32 %v725, 1.442695
        %v742 = vpow.pop %v741
        %v743 = vmul.f32 %v726, 1.442695
        %v744 = vpow.pop %v743
        %v745 = vmul.f32 %v727, 1.442695
        %v746 = vpow.pop %v745
        %v747 = vmul.f32 %v728, 1.442695
        %v748 = vpow.pop %v747
        %v749 = vmul.f32 %v729, 1.442695
        %v750 = vpow.pop %v749
        %v751 = vmul.f32 %v730, 1.442695
        %v752 = vpow.pop %v751
        %v753 = vmul.f32 %v731, 1.442695
        %v754 = vpow.pop %v753
        %v755 = vmul.f32 %v732, 1.442695
        %v756 = vpow.pop %v755
        %v757 = vmul.f32 %v733, 1.442695
        %v758 = vpow.pop %v757
        %v759 = vmul.f32 %v734, 1.442695
        %v760 = vpow.pop %v759
        %v761 = vmul.f32 %v735, 1.442695
        %v762 = vpow.pop %v761
        %v763 = vmul.f32 %v736, 1.442695
        %v764 = vpow.pop %v763
        %v765 = vmul.f32 %v737, 1.442695
        %v766 = vpow.pop %v765
        %v767 = vmul.f32 %v738, 1.442695
        %v768 = vpow.pop %v767
        %v769 = vmul.f32 %v739, 1.442695
        %v770 = vpow.pop %v769
        %v771 = vmul.f32 %v740, 1.442695
        %v772 = vpow.pop %v771
        %774 = vset.pattern.permute.xlu0 0
        %775 = vperm.xlu0 %774, %v724
        %v776 = vpop.permute.xlu0 %775
        %778 = vst [vmem:[%s243] sm:$0x1] %v776
        %780 = vset.pattern.permute.xlu0 0
        %781 = vperm.xlu0 %780, %v742
        %v782 = vpop.permute.xlu0 %781
        %785 = vset.pattern.permute.xlu0 0
        %786 = vperm.xlu0 %785, %v744
        %v787 = vpop.permute.xlu0 %786
        %790 = vset.pattern.permute.xlu0 0
        %791 = vperm.xlu0 %790, %v746
        %v792 = vpop.permute.xlu0 %791
        %795 = vset.pattern.permute.xlu0 0
        %796 = vperm.xlu0 %795, %v748
        %v797 = vpop.permute.xlu0 %796
        %800 = vset.pattern.permute.xlu0 0
        %801 = vperm.xlu0 %800, %v750
        %v802 = vpop.permute.xlu0 %801
        %805 = vset.pattern.permute.xlu0 0
        %806 = vperm.xlu0 %805, %v752
        %v807 = vpop.permute.xlu0 %806
        %810 = vset.pattern.permute.xlu0 0
        %811 = vperm.xlu0 %810, %v754
        %v812 = vpop.permute.xlu0 %811
        %815 = vset.pattern.permute.xlu0 0
        %816 = vperm.xlu0 %815, %v756
        %v817 = vpop.permute.xlu0 %816
        %820 = vset.pattern.permute.xlu0 0
        %821 = vperm.xlu0 %820, %v758
        %v822 = vpop.permute.xlu0 %821
        %825 = vset.pattern.permute.xlu0 0
        %826 = vperm.xlu0 %825, %v760
        %v827 = vpop.permute.xlu0 %826
        %830 = vset.pattern.permute.xlu0 0
        %831 = vperm.xlu0 %830, %v762
        %v832 = vpop.permute.xlu0 %831
        %835 = vset.pattern.permute.xlu0 0
        %836 = vperm.xlu0 %835, %v764
        %v837 = vpop.permute.xlu0 %836
        %840 = vset.pattern.permute.xlu0 0
        %841 = vperm.xlu0 %840, %v766
        %v842 = vpop.permute.xlu0 %841
        %845 = vset.pattern.permute.xlu0 0
        %846 = vperm.xlu0 %845, %v768
        %v847 = vpop.permute.xlu0 %846
        %850 = vset.pattern.permute.xlu0 0
        %851 = vperm.xlu0 %850, %v770
        %v852 = vpop.permute.xlu0 %851
        %855 = vset.pattern.permute.xlu0 0
        %856 = vperm.xlu0 %855, %v772
        %v857 = vpop.permute.xlu0 %856
        %v859 = vmul.f32 %v496, %v782
        %v860 = vmul.f32 %v498, %v787
        %v861 = vmul.f32 %v500, %v792
        %v862 = vmul.f32 %v502, %v797
        %v863 = vmul.f32 %v504, %v802
        %v864 = vmul.f32 %v506, %v807
        %v865 = vmul.f32 %v508, %v812
        %v866 = vmul.f32 %v510, %v817
        %v867 = vmul.f32 %v512, %v822
        %v868 = vmul.f32 %v514, %v827
        %v869 = vmul.f32 %v516, %v832
        %v870 = vmul.f32 %v518, %v837
        %v871 = vmul.f32 %v520, %v842
        %v872 = vmul.f32 %v522, %v847
        %v873 = vmul.f32 %v524, %v852
        %v874 = vmul.f32 %v526, %v857
        %v875 = vadd.f32 %v859, %v860
        %v876 = vadd.f32 %v875, %v861
        %v877 = vadd.f32 %v876, %v862
        %v878 = vadd.f32 %v877, %v863
        %v879 = vadd.f32 %v878, %v864
        %v880 = vadd.f32 %v879, %v865
        %v881 = vadd.f32 %v880, %v866
        %v882 = vadd.f32 %v881, %v867
        %v883 = vadd.f32 %v882, %v868
        %v884 = vadd.f32 %v883, %v869
        %v885 = vadd.f32 %v884, %v870
        %v886 = vadd.f32 %v885, %v871
        %v887 = vadd.f32 %v886, %v872
        %v888 = vadd.f32 %v887, %v873
        %v889 = vadd.f32 %v888, %v874
        %v890 = vrot.slane %v889, 4
        %v891 = vadd.f32 %v889, %v890
        %v892 = vrot.slane %v891, 2
        %v893 = vadd.f32 %v891, %v892
        %v894 = vrot.slane %v893, 1
        %v895 = vadd.f32 %v893, %v894
        %896 = vst [vmem:[%s249] sm:$0x1] %v895
        %s897 = sadd.s32 %s263, 128
        %p898 = scmp.lt.s32.totalorder %s262, %s897
        %s899 = sadd.s32 %s262, 128
        %p900 = scmp.lt.s32.totalorder %s263, %s899
        %p901 = pnand %p898, %p900
        %p902 = pneg %p901
        // Predicated region
        $region33: #{tpu_custom_call.1} parent=23 // pred_check
          _
        $region34: #{tpu_custom_call.1} parent=23 // pred_check_branch
          %904 = sbr.rel (%p901) target = $region36
        $region35: #{tpu_custom_call.1} parent=23 // pred_region
          %v905 = vlaneseq
          %v906 = vshrl.u32 %v905, 7
          %v907 = vadd.s32 %v906, 8
          %v908 = vadd.s32 %v906, 16
          %v909 = vadd.s32 %v906, 24
          %v910 = vadd.s32 %v906, 32
          %v911 = vadd.s32 %v906, 40
          %v912 = vadd.s32 %v906, 48
          %v913 = vadd.s32 %v906, 56
          %v914 = vadd.s32 %v906, 64
          %v915 = vadd.s32 %v906, 72
          %v916 = vadd.s32 %v906, 80
          %v917 = vadd.s32 %v906, 88
          %v918 = vadd.s32 %v906, 96
          %v919 = vadd.s32 %v906, 104
          %v920 = vadd.s32 %v906, 112
          %v921 = vadd.s32 %v906, 120
          %v922 = vlaneseq
          %v923 = vand.u32 %v922, 127
          %s924 = ssub.s32 %s262, %s263
          %v925 = vstv %s924
          %v926 = vadd.s32 %v906, %v925
          %v927 = vadd.s32 %v907, %v925
          %v928 = vadd.s32 %v908, %v925
          %v929 = vadd.s32 %v909, %v925
          %v930 = vadd.s32 %v910, %v925
          %v931 = vadd.s32 %v911, %v925
          %v932 = vadd.s32 %v912, %v925
          %v933 = vadd.s32 %v913, %v925
          %v934 = vadd.s32 %v914, %v925
          %v935 = vadd.s32 %v915, %v925
          %v936 = vadd.s32 %v916, %v925
          %v937 = vadd.s32 %v917, %v925
          %v938 = vadd.s32 %v918, %v925
          %v939 = vadd.s32 %v919, %v925
          %v940 = vadd.s32 %v920, %v925
          %v941 = vadd.s32 %v921, %v925
          %vm942 = vcmp.eq.s32.totalorder %v923, %v926
          %vm943 = vcmp.eq.s32.totalorder %v923, %v927
          %vm944 = vcmp.eq.s32.totalorder %v923, %v928
          %vm945 = vcmp.eq.s32.totalorder %v923, %v929
          %vm946 = vcmp.eq.s32.totalorder %v923, %v930
          %vm947 = vcmp.eq.s32.totalorder %v923, %v931
          %vm948 = vcmp.eq.s32.totalorder %v923, %v932
          %vm949 = vcmp.eq.s32.totalorder %v923, %v933
          %vm950 = vcmp.eq.s32.totalorder %v923, %v934
          %vm951 = vcmp.eq.s32.totalorder %v923, %v935
          %vm952 = vcmp.eq.s32.totalorder %v923, %v936
          %vm953 = vcmp.eq.s32.totalorder %v923, %v937
          %vm954 = vcmp.eq.s32.totalorder %v923, %v938
          %vm955 = vcmp.eq.s32.totalorder %v923, %v939
          %vm956 = vcmp.eq.s32.totalorder %v923, %v940
          %vm957 = vcmp.eq.s32.totalorder %v923, %v941
          %v958 = vstv %s262
          %v959 = vadd.s32 %v906, %v958
          %v960 = vadd.s32 %v907, %v958
          %v961 = vadd.s32 %v908, %v958
          %v962 = vadd.s32 %v909, %v958
          %v963 = vadd.s32 %v910, %v958
          %v964 = vadd.s32 %v911, %v958
          %v965 = vadd.s32 %v912, %v958
          %v966 = vadd.s32 %v913, %v958
          %v967 = vadd.s32 %v914, %v958
          %v968 = vadd.s32 %v915, %v958
          %v969 = vadd.s32 %v916, %v958
          %v970 = vadd.s32 %v917, %v958
          %v971 = vadd.s32 %v918, %v958
          %v972 = vadd.s32 %v919, %v958
          %v973 = vadd.s32 %v920, %v958
          %v974 = vadd.s32 %v921, %v958
          %vm975 = vcmp.lt.s32.totalorder %v959, 384
          %vm976 = vcmp.lt.s32.totalorder %v960, 384
          %vm977 = vcmp.lt.s32.totalorder %v961, 384
          %vm978 = vcmp.lt.s32.totalorder %v962, 384
          %vm979 = vcmp.lt.s32.totalorder %v963, 384
          %vm980 = vcmp.lt.s32.totalorder %v964, 384
          %vm981 = vcmp.lt.s32.totalorder %v965, 384
          %vm982 = vcmp.lt.s32.totalorder %v966, 384
          %vm983 = vcmp.lt.s32.totalorder %v967, 384
          %vm984 = vcmp.lt.s32.totalorder %v968, 384
          %vm985 = vcmp.lt.s32.totalorder %v969, 384
          %vm986 = vcmp.lt.s32.totalorder %v970, 384
          %vm987 = vcmp.lt.s32.totalorder %v971, 384
          %vm988 = vcmp.lt.s32.totalorder %v972, 384
          %vm989 = vcmp.lt.s32.totalorder %v973, 384
          %vm990 = vcmp.lt.s32.totalorder %v974, 384
          %v991 = vsel %vm975, 1, 0
          %v992 = vsel %vm976, 1, 0
          %v993 = vsel %vm977, 1, 0
          %v994 = vsel %vm978, 1, 0
          %v995 = vsel %vm979, 1, 0
          %v996 = vsel %vm980, 1, 0
          %v997 = vsel %vm981, 1, 0
          %v998 = vsel %vm982, 1, 0
          %v999 = vsel %vm983, 1, 0
          %v1000 = vsel %vm984, 1, 0
          %v1001 = vsel %vm985, 1, 0
          %v1002 = vsel %vm986, 1, 0
          %v1003 = vsel %vm987, 1, 0
          %v1004 = vsel %vm988, 1, 0
          %v1005 = vsel %vm989, 1, 0
          %v1006 = vsel %vm990, 1, 0
          %vm1007 = vcmp.eq.s32.totalorder %v991, 1
          %vm1008 = vcmp.eq.s32.totalorder %v992, 1
          %vm1009 = vcmp.eq.s32.totalorder %v993, 1
          %vm1010 = vcmp.eq.s32.totalorder %v994, 1
          %vm1011 = vcmp.eq.s32.totalorder %v995, 1
          %vm1012 = vcmp.eq.s32.totalorder %v996, 1
          %vm1013 = vcmp.eq.s32.totalorder %v997, 1
          %vm1014 = vcmp.eq.s32.totalorder %v998, 1
          %vm1015 = vcmp.eq.s32.totalorder %v999, 1
          %vm1016 = vcmp.eq.s32.totalorder %v1000, 1
          %vm1017 = vcmp.eq.s32.totalorder %v1001, 1
          %vm1018 = vcmp.eq.s32.totalorder %v1002, 1
          %vm1019 = vcmp.eq.s32.totalorder %v1003, 1
          %vm1020 = vcmp.eq.s32.totalorder %v1004, 1
          %vm1021 = vcmp.eq.s32.totalorder %v1005, 1
          %vm1022 = vcmp.eq.s32.totalorder %v1006, 1
          %vm1023 = vmand %vm942, %vm1007
          %vm1024 = vmand %vm943, %vm1008
          %vm1025 = vmand %vm944, %vm1009
          %vm1026 = vmand %vm945, %vm1010
          %vm1027 = vmand %vm946, %vm1011
          %vm1028 = vmand %vm947, %vm1012
          %vm1029 = vmand %vm948, %vm1013
          %vm1030 = vmand %vm949, %vm1014
          %vm1031 = vmand %vm950, %vm1015
          %vm1032 = vmand %vm951, %vm1016
          %vm1033 = vmand %vm952, %vm1017
          %vm1034 = vmand %vm953, %vm1018
          %vm1035 = vmand %vm954, %vm1019
          %vm1036 = vmand %vm955, %vm1020
          %vm1037 = vmand %vm956, %vm1021
          %vm1038 = vmand %vm957, %vm1022
          %v1039 = vsel %vm1023, %v280, 0.0
          %v1040 = vsel %vm1024, %v281, 0.0
          %v1041 = vsel %vm1025, %v282, 0.0
          %v1042 = vsel %vm1026, %v283, 0.0
          %v1043 = vsel %vm1027, %v284, 0.0
          %v1044 = vsel %vm1028, %v285, 0.0
          %v1045 = vsel %vm1029, %v286, 0.0
          %v1046 = vsel %vm1030, %v287, 0.0
          %v1047 = vsel %vm1031, %v288, 0.0
          %v1048 = vsel %vm1032, %v289, 0.0
          %v1049 = vsel %vm1033, %v290, 0.0
          %v1050 = vsel %vm1034, %v291, 0.0
          %v1051 = vsel %vm1035, %v292, 0.0
          %v1052 = vsel %vm1036, %v293, 0.0
          %v1053 = vsel %vm1037, %v294, 0.0
          %v1054 = vsel %vm1038, %v295, 0.0
          %1055 = vadd.xlane.f32.xlu0 %v1039
          %v1056 = vpop.xlane.xlu0 %1055
          %1057 = vadd.xlane.f32.xlu0 %v1040
          %v1058 = vpop.xlane.xlu0 %1057
          %1059 = vadd.xlane.f32.xlu0 %v1041
          %v1060 = vpop.xlane.xlu0 %1059
          %1061 = vadd.xlane.f32.xlu0 %v1042
          %v1062 = vpop.xlane.xlu0 %1061
          %1063 = vadd.xlane.f32.xlu0 %v1043
          %v1064 = vpop.xlane.xlu0 %1063
          %1065 = vadd.xlane.f32.xlu0 %v1044
          %v1066 = vpop.xlane.xlu0 %1065
          %1067 = vadd.xlane.f32.xlu0 %v1045
          %v1068 = vpop.xlane.xlu0 %1067
          %1069 = vadd.xlane.f32.xlu0 %v1046
          %v1070 = vpop.xlane.xlu0 %1069
          %1071 = vadd.xlane.f32.xlu0 %v1047
          %v1072 = vpop.xlane.xlu0 %1071
          %1073 = vadd.xlane.f32.xlu0 %v1048
          %v1074 = vpop.xlane.xlu0 %1073
          %1075 = vadd.xlane.f32.xlu0 %v1049
          %v1076 = vpop.xlane.xlu0 %1075
          %1077 = vadd.xlane.f32.xlu0 %v1050
          %v1078 = vpop.xlane.xlu0 %1077
          %1079 = vadd.xlane.f32.xlu0 %v1051
          %v1080 = vpop.xlane.xlu0 %1079
          %1081 = vadd.xlane.f32.xlu0 %v1052
          %v1082 = vpop.xlane.xlu0 %1081
          %1083 = vadd.xlane.f32.xlu0 %v1053
          %v1084 = vpop.xlane.xlu0 %1083
          %1085 = vadd.xlane.f32.xlu0 %v1054
          %v1086 = vpop.xlane.xlu0 %1085
          %v1087 = vadd.f32 %v1056, %v1058
          %v1088 = vadd.f32 %v1087, %v1060
          %v1089 = vadd.f32 %v1088, %v1062
          %v1090 = vadd.f32 %v1089, %v1064
          %v1091 = vadd.f32 %v1090, %v1066
          %v1092 = vadd.f32 %v1091, %v1068
          %v1093 = vadd.f32 %v1092, %v1070
          %v1094 = vadd.f32 %v1093, %v1072
          %v1095 = vadd.f32 %v1094, %v1074
          %v1096 = vadd.f32 %v1095, %v1076
          %v1097 = vadd.f32 %v1096, %v1078
          %v1098 = vadd.f32 %v1097, %v1080
          %v1099 = vadd.f32 %v1098, %v1082
          %v1100 = vadd.f32 %v1099, %v1084
          %v1101 = vadd.f32 %v1100, %v1086
          %v1102 = vrot.slane %v1101, 4
          %v1103 = vadd.f32 %v1101, %v1102
          %v1104 = vrot.slane %v1103, 2
          %v1105 = vadd.f32 %v1103, %v1104
          %v1106 = vrot.slane %v1105, 1
          %v1107 = vadd.f32 %v1105, %v1106
          %v1108 = vld [vmem:[%s261] sm:$0x1]
          %v1109 = vadd.f32 %v1108, %v1107
          %vm1110 = vcmask 0
          %1111 = vst.msk [vmem:[%s261] sm:$0x1] %vm1110, %v1109
        $region36: #{tpu_custom_call.1} parent=23 // pred_fallthru
          _
        %p1112 = scmp.eq.s32.totalorder %s30, 2
        // Predicated region
        $region37: #{tpu_custom_call.1} parent=23 // pred_check
          %p1113 = pneg %p1112
        $region38: #{tpu_custom_call.1} parent=23 // pred_check_branch
          %1115 = sbr.rel (%p1113) target = $region40
        $region39: #{tpu_custom_call.1} parent=23 // pred_region
          %v1116 = vld [vmem:[#allocation3] sm:$0xff]
          %v1117 = vld [vmem:[#allocation3 + $0x8] sm:$0xff]
          %v1118 = vld [vmem:[#allocation3 + $0x10] sm:$0xff]
          %v1119 = vld [vmem:[#allocation3 + $0x18] sm:$0xff]
          %v1120 = vld [vmem:[#allocation3 + $0x20] sm:$0xff]
          %v1121 = vld [vmem:[#allocation3 + $0x28] sm:$0xff]
          %v1122 = vld [vmem:[#allocation3 + $0x30] sm:$0xff]
          %v1123 = vld [vmem:[#allocation3 + $0x38] sm:$0xff]
          %v1124 = vld [vmem:[#allocation3 + $0x40] sm:$0xff]
          %v1125 = vld [vmem:[#allocation3 + $0x48] sm:$0xff]
          %v1126 = vld [vmem:[#allocation3 + $0x50] sm:$0xff]
          %v1127 = vld [vmem:[#allocation3 + $0x58] sm:$0xff]
          %v1128 = vld [vmem:[#allocation3 + $0x60] sm:$0xff]
          %v1129 = vld [vmem:[#allocation3 + $0x68] sm:$0xff]
          %v1130 = vld [vmem:[#allocation3 + $0x70] sm:$0xff]
          %v1131 = vld [vmem:[#allocation3 + $0x78] sm:$0xff]
          %v1132 = vlog2.pop %v1116
          %v1133 = vmul.f32 %v1132, 0.6931472
          %v1134 = vlog2.pop %v1117
          %v1135 = vmul.f32 %v1134, 0.6931472
          %v1136 = vlog2.pop %v1118
          %v1137 = vmul.f32 %v1136, 0.6931472
          %v1138 = vlog2.pop %v1119
          %v1139 = vmul.f32 %v1138, 0.6931472
          %v1140 = vlog2.pop %v1120
          %v1141 = vmul.f32 %v1140, 0.6931472
          %v1142 = vlog2.pop %v1121
          %v1143 = vmul.f32 %v1142, 0.6931472
          %v1144 = vlog2.pop %v1122
          %v1145 = vmul.f32 %v1144, 0.6931472
          %v1146 = vlog2.pop %v1123
          %v1147 = vmul.f32 %v1146, 0.6931472
          %v1148 = vlog2.pop %v1124
          %v1149 = vmul.f32 %v1148, 0.6931472
          %v1150 = vlog2.pop %v1125
          %v1151 = vmul.f32 %v1150, 0.6931472
          %v1152 = vlog2.pop %v1126
          %v1153 = vmul.f32 %v1152, 0.6931472
          %v1154 = vlog2.pop %v1127
          %v1155 = vmul.f32 %v1154, 0.6931472
          %v1156 = vlog2.pop %v1128
          %v1157 = vmul.f32 %v1156, 0.6931472
          %v1158 = vlog2.pop %v1129
          %v1159 = vmul.f32 %v1158, 0.6931472
          %v1160 = vlog2.pop %v1130
          %v1161 = vmul.f32 %v1160, 0.6931472
          %v1162 = vlog2.pop %v1131
          %v1163 = vmul.f32 %v1162, 0.6931472
          %v1164 = vld [vmem:[#allocation2] sm:$0xff]
          %v1165 = vld [vmem:[#allocation2 + $0x8] sm:$0xff]
          %v1166 = vld [vmem:[#allocation2 + $0x10] sm:$0xff]
          %v1167 = vld [vmem:[#allocation2 + $0x18] sm:$0xff]
          %v1168 = vld [vmem:[#allocation2 + $0x20] sm:$0xff]
          %v1169 = vld [vmem:[#allocation2 + $0x28] sm:$0xff]
          %v1170 = vld [vmem:[#allocation2 + $0x30] sm:$0xff]
          %v1171 = vld [vmem:[#allocation2 + $0x38] sm:$0xff]
          %v1172 = vld [vmem:[#allocation2 + $0x40] sm:$0xff]
          %v1173 = vld [vmem:[#allocation2 + $0x48] sm:$0xff]
          %v1174 = vld [vmem:[#allocation2 + $0x50] sm:$0xff]
          %v1175 = vld [vmem:[#allocation2 + $0x58] sm:$0xff]
          %v1176 = vld [vmem:[#allocation2 + $0x60] sm:$0xff]
          %v1177 = vld [vmem:[#allocation2 + $0x68] sm:$0xff]
          %v1178 = vld [vmem:[#allocation2 + $0x70] sm:$0xff]
          %v1179 = vld [vmem:[#allocation2 + $0x78] sm:$0xff]
          %v1180 = vadd.f32 %v1133, %v1164
          %v1181 = vadd.f32 %v1135, %v1165
          %v1182 = vadd.f32 %v1137, %v1166
          %v1183 = vadd.f32 %v1139, %v1167
          %v1184 = vadd.f32 %v1141, %v1168
          %v1185 = vadd.f32 %v1143, %v1169
          %v1186 = vadd.f32 %v1145, %v1170
          %v1187 = vadd.f32 %v1147, %v1171
          %v1188 = vadd.f32 %v1149, %v1172
          %v1189 = vadd.f32 %v1151, %v1173
          %v1190 = vadd.f32 %v1153, %v1174
          %v1191 = vadd.f32 %v1155, %v1175
          %v1192 = vadd.f32 %v1157, %v1176
          %v1193 = vadd.f32 %v1159, %v1177
          %v1194 = vadd.f32 %v1161, %v1178
          %v1195 = vadd.f32 %v1163, %v1179
          %v1196 = vlaneseq
          %v1197 = vshrl.u32 %v1196, 7
          %v1198 = vadd.s32 %v1197, 8
          %v1199 = vadd.s32 %v1197, 16
          %v1200 = vadd.s32 %v1197, 24
          %v1201 = vadd.s32 %v1197, 32
          %v1202 = vadd.s32 %v1197, 40
          %v1203 = vadd.s32 %v1197, 48
          %v1204 = vadd.s32 %v1197, 56
          %v1205 = vadd.s32 %v1197, 64
          %v1206 = vadd.s32 %v1197, 72
          %v1207 = vadd.s32 %v1197, 80
          %v1208 = vadd.s32 %v1197, 88
          %v1209 = vadd.s32 %v1197, 96
          %v1210 = vadd.s32 %v1197, 104
          %v1211 = vadd.s32 %v1197, 112
          %v1212 = vadd.s32 %v1197, 120
          %v1213 = vstv %s262
          %v1214 = vadd.s32 %v1197, %v1213
          %v1215 = vadd.s32 %v1198, %v1213
          %v1216 = vadd.s32 %v1199, %v1213
          %v1217 = vadd.s32 %v1200, %v1213
          %v1218 = vadd.s32 %v1201, %v1213
          %v1219 = vadd.s32 %v1202, %v1213
          %v1220 = vadd.s32 %v1203, %v1213
          %v1221 = vadd.s32 %v1204, %v1213
          %v1222 = vadd.s32 %v1205, %v1213
          %v1223 = vadd.s32 %v1206, %v1213
          %v1224 = vadd.s32 %v1207, %v1213
          %v1225 = vadd.s32 %v1208, %v1213
          %v1226 = vadd.s32 %v1209, %v1213
          %v1227 = vadd.s32 %v1210, %v1213
          %v1228 = vadd.s32 %v1211, %v1213
          %v1229 = vadd.s32 %v1212, %v1213
          %vm1230 = vcmp.lt.s32.totalorder %v1214, 384
          %vm1231 = vcmp.lt.s32.totalorder %v1215, 384
          %vm1232 = vcmp.lt.s32.totalorder %v1216, 384
          %vm1233 = vcmp.lt.s32.totalorder %v1217, 384
          %vm1234 = vcmp.lt.s32.totalorder %v1218, 384
          %vm1235 = vcmp.lt.s32.totalorder %v1219, 384
          %vm1236 = vcmp.lt.s32.totalorder %v1220, 384
          %vm1237 = vcmp.lt.s32.totalorder %v1221, 384
          %vm1238 = vcmp.lt.s32.totalorder %v1222, 384
          %vm1239 = vcmp.lt.s32.totalorder %v1223, 384
          %vm1240 = vcmp.lt.s32.totalorder %v1224, 384
          %vm1241 = vcmp.lt.s32.totalorder %v1225, 384
          %vm1242 = vcmp.lt.s32.totalorder %v1226, 384
          %vm1243 = vcmp.lt.s32.totalorder %v1227, 384
          %vm1244 = vcmp.lt.s32.totalorder %v1228, 384
          %vm1245 = vcmp.lt.s32.totalorder %v1229, 384
          %v1246 = vsel %vm1230, %v1180, 0.0
          %v1247 = vsel %vm1231, %v1181, 0.0
          %v1248 = vsel %vm1232, %v1182, 0.0
          %v1249 = vsel %vm1233, %v1183, 0.0
          %v1250 = vsel %vm1234, %v1184, 0.0
          %v1251 = vsel %vm1235, %v1185, 0.0
          %v1252 = vsel %vm1236, %v1186, 0.0
          %v1253 = vsel %vm1237, %v1187, 0.0
          %v1254 = vsel %vm1238, %v1188, 0.0
          %v1255 = vsel %vm1239, %v1189, 0.0
          %v1256 = vsel %vm1240, %v1190, 0.0
          %v1257 = vsel %vm1241, %v1191, 0.0
          %v1258 = vsel %vm1242, %v1192, 0.0
          %v1259 = vsel %vm1243, %v1193, 0.0
          %v1260 = vsel %vm1244, %v1194, 0.0
          %v1261 = vsel %vm1245, %v1195, 0.0
          %v1262 = vsel %vm655, %v1246, 0.0
          %v1263 = vsel %vm655, %v1247, 0.0
          %v1264 = vadd.f32 %v1262, %v1263
          %v1265 = vsel %vm655, %v1248, 0.0
          %v1266 = vadd.f32 %v1264, %v1265
          %v1267 = vsel %vm655, %v1249, 0.0
          %v1268 = vadd.f32 %v1266, %v1267
          %v1269 = vsel %vm655, %v1250, 0.0
          %v1270 = vadd.f32 %v1268, %v1269
          %v1271 = vsel %vm655, %v1251, 0.0
          %v1272 = vadd.f32 %v1270, %v1271
          %v1273 = vsel %vm655, %v1252, 0.0
          %v1274 = vadd.f32 %v1272, %v1273
          %v1275 = vsel %vm655, %v1253, 0.0
          %v1276 = vadd.f32 %v1274, %v1275
          %v1277 = vsel %vm655, %v1254, 0.0
          %v1278 = vadd.f32 %v1276, %v1277
          %v1279 = vsel %vm655, %v1255, 0.0
          %v1280 = vadd.f32 %v1278, %v1279
          %v1281 = vsel %vm655, %v1256, 0.0
          %v1282 = vadd.f32 %v1280, %v1281
          %v1283 = vsel %vm655, %v1257, 0.0
          %v1284 = vadd.f32 %v1282, %v1283
          %v1285 = vsel %vm655, %v1258, 0.0
          %v1286 = vadd.f32 %v1284, %v1285
          %v1287 = vsel %vm655, %v1259, 0.0
          %v1288 = vadd.f32 %v1286, %v1287
          %v1289 = vsel %vm655, %v1260, 0.0
          %v1290 = vadd.f32 %v1288, %v1289
          %v1291 = vsel %vm655, %v1261, 0.0
          %v1292 = vadd.f32 %v1290, %v1291
          %v1293 = vrot.slane %v1292, 4
          %v1294 = vadd.f32 %v1292, %v1293
          %v1295 = vrot.slane %v1294, 2
          %v1296 = vadd.f32 %v1294, %v1295
          %v1297 = vrot.slane %v1296, 1
          %v1298 = vadd.f32 %v1296, %v1297
          %vm1299 = vcmask 0
          %1300 = vst.msk [vmem:[%s258] sm:$0x1] %vm1299, %v1298
        $region40: #{tpu_custom_call.1} parent=23 // pred_fallthru
          _
        %p1301 = scmp.lt.s32.totalorder %s29, 2
        %s1302 = scalar_select %p1301, %s29, 2
        %s1303 = scalar_lea.vmem %s1, %s1302
        %s1304 = sand.u32 %s101, 1
        %s1305 = scalar_lea.sflag [#allocation6], %s1304
        %s1306 = sand.u32 %s101, 1
        %s1307 = scalar_lea.vmem [#allocation7], %s1306
        %s1308 = sand.u32 %s129, 1
        %s1309 = scalar_lea.sflag [#allocation9], %s1308
        %s1310 = sand.u32 %s129, 1
        %s1311 = scalar_lea.vmem [#allocation8], %s1310
        %p1312 = scmp.lt.s32.totalorder %s29, 2
        %s1313 = scalar_select %p1312, %s29, 2
        %s1314 = scalar_lea.vmem %s4, %s1313
        // Predicated region
        $region41: #{tpu_custom_call.1} parent=23 // pred_check
          %p1315 = pneg %p83
        $region42: #{tpu_custom_call.1} parent=23 // pred_check_branch
          %1317 = sbr.rel (%p1315) target = $region44
        $region43: #{tpu_custom_call.1} parent=23 // pred_region
          _
        $region44: #{tpu_custom_call.1} parent=23 // pred_fallthru
          _
        // Predicated region
        $region45: #{tpu_custom_call.1} parent=23 // pred_check
          %p1318 = pneg %p111
        $region46: #{tpu_custom_call.1} parent=23 // pred_check_branch
          %1320 = sbr.rel (%p1318) target = $region48
        $region47: #{tpu_custom_call.1} parent=23 // pred_region
          %s1322 = ssub.s32 16, 16
          %1323 = vsyncadd %s1305, %s1322
          %s1324 = smul.addr %s29, 3
          %s1325 = sadd.s32 %s30, %s1324
          %s1326 = smul.addr %s1325, 16
          %s1327 = scalar_lea.hbm %s2, %s1326
          %s1329 = sshll.u32 %s1307, 4
          %s1330 = int_to_ptr.vmem [resolvable:$true] %s1329
          %1332 = dma.vmem_to_hbm [thread:$0]  %s1330, 16, %s1327, %s1305
        $region48: #{tpu_custom_call.1} parent=23 // pred_fallthru
          _
        // Predicated region
        $region49: #{tpu_custom_call.1} parent=23 // pred_check
          %p1333 = pneg %p139
        $region50: #{tpu_custom_call.1} parent=23 // pred_check_branch
          %1335 = sbr.rel (%p1333) target = $region52
        $region51: #{tpu_custom_call.1} parent=23 // pred_region
          %s1337 = ssub.s32 16, 16
          %1338 = vsyncadd %s1309, %s1337
          %s1339 = smul.addr %s29, 3
          %s1340 = sadd.s32 %s30, %s1339
          %s1341 = smul.addr %s1340, 16
          %s1342 = scalar_lea.hbm %s3, %s1341
          %s1344 = sshll.u32 %s1311, 4
          %s1345 = int_to_ptr.vmem [resolvable:$true] %s1344
          %1347 = dma.vmem_to_hbm [thread:$0]  %s1345, 16, %s1342, %s1309
        $region52: #{tpu_custom_call.1} parent=23 // pred_fallthru
          _
        // Predicated region
        $region53: #{tpu_custom_call.1} parent=23 // pred_check
          %p1348 = pneg %p165
        $region54: #{tpu_custom_call.1} parent=23 // pred_check_branch
          %1350 = sbr.rel (%p1348) target = $region56
        $region55: #{tpu_custom_call.1} parent=23 // pred_region
          _
        $region56: #{tpu_custom_call.1} parent=23 // pred_fallthru
          _
      $region24: #{tpu_custom_call.1} parent=5 // pred_fallthru
        _
      %p1351 = scmp.le.s32.totalorder 2, %s20
      // Predicated region
      $region57: #{tpu_custom_call.1} parent=5 // pred_check
        %p1352 = pneg %p1351
      $region58: #{tpu_custom_call.1} parent=5 // pred_check_branch
        %1354 = sbr.rel (%p1352) target = $region60
      $region59: #{tpu_custom_call.1} parent=5 // pred_region
        %s1355 = ssub.s32 %s20, 2
        // Predicated region
        $region61: #{tpu_custom_call.1} parent=59 // pred_check
          %p1356 = pneg %p89
        $region62: #{tpu_custom_call.1} parent=59 // pred_check_branch
          %1358 = sbr.rel (%p1356) target = $region64
        $region63: #{tpu_custom_call.1} parent=59 // pred_region
          %p1359 = scmp.lt.s32.totalorder %s31, 2
          %s1360 = scalar_select %p1359, %s31, 2
          %s1361 = scalar_lea.vmem %s1, %s1360
        $region64: #{tpu_custom_call.1} parent=59 // pred_fallthru
          _
        // Predicated region
        $region65: #{tpu_custom_call.1} parent=59 // pred_check
          %p1362 = pneg %p117
        $region66: #{tpu_custom_call.1} parent=59 // pred_check_branch
          %1364 = sbr.rel (%p1362) target = $region68
        $region67: #{tpu_custom_call.1} parent=59 // pred_region
          %s1365 = sand.u32 %s102, 1
          %s1366 = scalar_lea.sflag [#allocation6], %s1365
          %s1367 = sand.u32 %s102, 1
          %s1368 = scalar_lea.vmem [#allocation7], %s1367
          %1369 = dma.done %s1366, 16
        $region68: #{tpu_custom_call.1} parent=59 // pred_fallthru
          _
        // Predicated region
        $region69: #{tpu_custom_call.1} parent=59 // pred_check
          %p1370 = pneg %p145
        $region70: #{tpu_custom_call.1} parent=59 // pred_check_branch
          %1372 = sbr.rel (%p1370) target = $region72
        $region71: #{tpu_custom_call.1} parent=59 // pred_region
          %s1373 = sand.u32 %s130, 1
          %s1374 = scalar_lea.sflag [#allocation9], %s1373
          %s1375 = sand.u32 %s130, 1
          %s1376 = scalar_lea.vmem [#allocation8], %s1375
          %1377 = dma.done %s1374, 16
        $region72: #{tpu_custom_call.1} parent=59 // pred_fallthru
          _
        // Predicated region
        $region73: #{tpu_custom_call.1} parent=59 // pred_check
          %p1378 = pneg %p171
        $region74: #{tpu_custom_call.1} parent=59 // pred_check_branch
          %1380 = sbr.rel (%p1378) target = $region76
        $region75: #{tpu_custom_call.1} parent=59 // pred_region
          %p1381 = scmp.lt.s32.totalorder %s31, 2
          %s1382 = scalar_select %p1381, %s31, 2
          %s1383 = scalar_lea.vmem %s4, %s1382
        $region76: #{tpu_custom_call.1} parent=59 // pred_fallthru
          _
      $region60: #{tpu_custom_call.1} parent=5 // pred_fallthru
        _
    $region6: #{tpu_custom_call.1} parent=1 // loop_footer
      %s24 = sadd.s32 1, %s20
    $region7: #{tpu_custom_call.1} parent=1 // loop_footer_branch
      %19 = sbr.rel target = $region3
    $region8: #{tpu_custom_call.1} parent=1 // loop_exit
      _
    %1384 = vsyncpa [#allocation5], 1
    %s1385 = scalar_lea.sflag [#allocation5], 1
    %1386 = vsyncpa %s1385, 1
    %1387 = vsyncpa [#allocation6], 1
    %s1388 = scalar_lea.sflag [#allocation6], 1
    %1389 = vsyncpa %s1388, 1
    %1390 = vsyncpa [#allocation9], 1
    %s1391 = scalar_lea.sflag [#allocation9], 1
    %1392 = vsyncpa %s1391, 1

</llo_original>
